<compile_context>
chip_gen: v5e
topology: v5e:2x2
jax: 0.10.0
libtpu: 0.0.40
codegen_flags: <defaults>
</compile_context>

<pallas_src>
import jax
import jax.numpy as jnp
from jax.experimental import pallas as pl
from jax.experimental.pallas import tpu as pltpu

LANE = 128


def _round_up(x, m):
    return (x + m - 1) // m * m


# ----------------------------- Pallas kernel ------------------------------

def yolo_mv_kernel(cols_ref, ws_ref, bs_ref, wc_ref, bc_ref, o_ref):
    """Fused: per-view stem matmul + SiLU -> view mean -> (fusion o head) matmul.

    cols_ref: (V, tm, K)      im2col'd stem input per view (bf16)
    ws_ref:   (K, Cf_p)       stem conv weight (bf16, channel-padded)
    bs_ref:   (1, Cf_p)       stem bias (f32)
    wc_ref:   (Cf_p, Cout_p)  (w_fuse @ w_head) / V  (bf16, padded)
    bc_ref:   (1, Cout_p)     b_fuse @ w_head + b_head (f32, padded)
    o_ref:    (tm, Cout_p)    detection logits (f32, lane-dense)
    """
    num_views = cols_ref.shape[0]
    acc = jnp.zeros(o_ref.shape, jnp.float32)
    for v in range(num_views):                      # static unroll over views
        pre = jnp.dot(cols_ref[v], ws_ref[...],
                      preferred_element_type=jnp.float32) + bs_ref[...]
        feat = pre * jax.nn.sigmoid(pre)            # SiLU on the f32 accumulator
        # view-mean folded into wc (pre-scaled by 1/V): just accumulate dots.
        acc = acc + jnp.dot(feat.astype(wc_ref.dtype), wc_ref[...],
                            preferred_element_type=jnp.float32)
    o_ref[...] = acc + bc_ref[...]


# ------------------------------ glue helpers -------------------------------

def im2col_3x3_s2_p1(x_nhwc):
    """Extract 3x3 stride-2 pad-1 patches.  x: (N, H, W, C) -> (N, Ho, Wo, 9*C)."""
    k, s, p = 3, 2, 1
    x = jnp.pad(x_nhwc, ((0, 0), (p, p), (p, p), (0, 0)))
    n, hp, wp, c = x.shape
    ho = (hp - k) // s + 1
    wo = (wp - k) // s + 1
    patches = []
    for i in range(k):
        for j in range(k):
            patches.append(x[:, i:i + s * ho:s, j:j + s * wo:s, :])
    cols = jnp.stack(patches, axis=3)               # (N, Ho, Wo, 9, C)
    return cols.reshape(n, ho, wo, k * k * c), ho, wo


def prepare_params(params, num_views, compute_dtype=jnp.bfloat16):
    """One-time weight folding / channel padding / bf16 cast (outside per-step path)."""
    cf = params["w_fuse"].shape[0]
    cout = params["w_head"].shape[1]
    cf_p = _round_up(cf, LANE)
    cout_p = _round_up(cout, LANE)

    # Fold fusion 1x1 conv + head 1x1 conv (no nonlinearity between them) into
    # one linear map, and fold the 1/V of the view-mean into the weight.
    w_comb = (params["w_fuse"] @ params["w_head"]) / num_views
    b_comb = params["b_fuse"] @ params["w_head"] + params["b_head"]

    w_stem = jnp.pad(params["w_stem"], ((0, 0), (0, cf_p - cf)))
    b_stem = jnp.pad(params["b_stem"], (0, cf_p - cf)).reshape(1, cf_p)
    w_comb = jnp.pad(w_comb, ((0, cf_p - cf), (0, cout_p - cout)))
    b_comb = jnp.pad(b_comb, (0, cout_p - cout)).reshape(1, cout_p)

    return dict(
        w_stem=w_stem.astype(compute_dtype),
        b_stem=b_stem.astype(jnp.float32),
        w_comb=w_comb.astype(compute_dtype),
        b_comb=b_comb.astype(jnp.float32),
        cf=cf, cout=cout, cf_p=cf_p, cout_p=cout_p,
        compute_dtype=compute_dtype,
    )


def yolov8_multiview_forward(images, prepped, tm=512, nhwc_out=False):
    """images: (V, B, Cin, H, W) NCHW per view.  Returns (B, Cout, Ho, Wo)."""
    num_views, batch, cin, h, w = images.shape
    cf_p, cout_p, cout = prepped["cf_p"], prepped["cout_p"], prepped["cout"]
    cdt = prepped["compute_dtype"]

    # NCHW -> NHWC once, then im2col for the 3x3/stride-2/pad-1 stem conv.
    # TODO(synk): at real (640x640) scale, do the 3x3 conv in-kernel as 9
    # accumulated (tm,Cin)x(Cin,Cf) matmuls over strided windows instead of
    # materializing the 9x-inflated im2col tensor in HBM.
    x = jnp.transpose(images, (0, 1, 3, 4, 2)).reshape(num_views * batch, h, w, cin)
    cols, ho, wo = im2col_3x3_s2_p1(x)
    k_dim = 9 * cin
    m = batch * ho * wo
    cols = cols.reshape(num_views, m, k_dim).astype(cdt)

    # Row tiling: one big tile if it fits, otherwise pad M to a tile multiple
    # (no hard divisibility asserts).  At real scale re-derive tm for the VMEM
    # budget (v7x: 64 MiB) and set vmem_limit_bytes in CompilerParams.
    tm_eff = min(tm, _round_up(m, LANE))
    m_pad = _round_up(m, tm_eff)
    if m_pad != m:
        cols = jnp.pad(cols, ((0, 0), (0, m_pad - m), (0, 0)))

    out = pl.pallas_call(
        yolo_mv_kernel,
        out_shape=jax.ShapeDtypeStruct((m_pad, cout_p), jnp.float32),
        grid=(m_pad // tm_eff,),
        in_specs=[
            pl.BlockSpec((num_views, tm_eff, k_dim), lambda i: (0, i, 0)),
            pl.BlockSpec((k_dim, cf_p), lambda i: (0, 0)),
            pl.BlockSpec((1, cf_p), lambda i: (0, 0)),
            pl.BlockSpec((cf_p, cout_p), lambda i: (0, 0)),
            pl.BlockSpec((1, cout_p), lambda i: (0, 0)),
        ],
        out_specs=pl.BlockSpec((tm_eff, cout_p), lambda i: (i, 0)),
        compiler_params=pltpu.CompilerParams(
            dimension_semantics=("parallel",)),
    )(cols, prepped["w_stem"], prepped["b_stem"],
      prepped["w_comb"], prepped["b_comb"])

    out = out[:m, :cout].reshape(batch, ho, wo, cout)
    if nhwc_out:        # keep NHWC if the consumer allows (saves a transpose)
        return out
    return out.transpose(0, 3, 1, 2)    # back to NCHW to match the module


def init_params(key, cin, cf, cout):
    ks = jax.random.split(key, 6)
    scale = 0.05
    # stem conv weight stored as (kh, kw, cin, cf) flattened to (9*cin, cf)
    w_stem = (scale * jax.random.normal(ks[0], (3, 3, cin, cf), jnp.float32)
              ).reshape(9 * cin, cf)
    b_stem = scale * jax.random.normal(ks[1], (cf,), jnp.float32)
    w_fuse = scale * jax.random.normal(ks[2], (cf, cf), jnp.float32)
    b_fuse = scale * jax.random.normal(ks[3], (cf,), jnp.float32)
    w_head = scale * jax.random.normal(ks[4], (cf, cout), jnp.float32)
    b_head = scale * jax.random.normal(ks[5], (cout,), jnp.float32)
    return dict(w_stem=w_stem, b_stem=b_stem, w_fuse=w_fuse, b_fuse=b_fuse,
                w_head=w_head, b_head=b_head)


def reference_forward(images, params):
    """Pure-JAX f32 reference mirroring the PyTorch semantics (unfused)."""
    num_views, batch, cin, h, w = images.shape
    cf = params["w_fuse"].shape[0]
    cout = params["w_head"].shape[1]
    x = jnp.transpose(images, (0, 1, 3, 4, 2)).reshape(num_views * batch, h, w, cin)
    cols, ho, wo = im2col_3x3_s2_p1(x)
    cols = cols.reshape(num_views * batch * ho * wo, -1)
    pre = cols @ params["w_stem"] + params["b_stem"]
    feat = pre * jax.nn.sigmoid(pre)
    feat = feat.reshape(num_views, batch * ho * wo, cf)
    fused = jnp.mean(feat, axis=0) @ params["w_fuse"] + params["b_fuse"]
    out = fused @ params["w_head"] + params["b_head"]
    return out.reshape(batch, ho, wo, cout).transpose(0, 3, 1, 2)


if __name__ == "__main__":
    V, B, Cin, H, W = 3, 2, 4, 16, 16      # 3 camera views, small shapes
    Cf, Cout = 32, 16                      # stand-ins for 512 feat / detect channels

    key = jax.random.PRNGKey(0)
    k_img, k_par = jax.random.split(key)
    images = jax.random.normal(k_img, (V, B, Cin, H, W), jnp.float32)
    params = init_params(k_par, Cin, Cf, Cout)

    prepped = prepare_params(params, num_views=V)
    out = yolov8_multiview_forward(images, prepped)
    out = jax.block_until_ready(out)

    ref = reference_forward(images, params)
    assert out.shape == (B, Cout, H // 2, W // 2), out.shape
    # bf16 matmul operands with f32 accumulation vs. pure-f32 reference.
    max_err = float(jnp.max(jnp.abs(out - ref)))
    assert jnp.allclose(out, ref, atol=2e-2, rtol=2e-2), max_err

    print("KERNEL_OK")
</pallas_src>

<mosaic_0001>
module attributes {stable_mosaic.version = 11 : i64} {
  func.func @yolo_mv_kernel(%arg0: i32, %arg1: memref<3x128x36xbf16, #tpu.memory_space<vmem>>, %arg2: memref<36x128xbf16, #tpu.memory_space<vmem>>, %arg3: memref<1x128xf32, #tpu.memory_space<vmem>>, %arg4: memref<128x128xbf16, #tpu.memory_space<vmem>>, %arg5: memref<1x128xf32, #tpu.memory_space<vmem>>, %arg6: memref<128x128xf32, #tpu.memory_space<vmem>>) attributes {dimension_semantics = [#tpu.dimension_semantics<parallel>], iteration_bounds = array<i64: 1>, scalar_prefetch = 0 : i64, scratch_operands = 0 : i64, tpu.core_type = #tpu.core_type<tc>, window_params = [{transform_indices = @transform_0, window_bounds = array<i64: 3, 128, 36>}, {pipeline_mode = #tpu.pipeline_mode<synchronous>, transform_indices = @transform_1, window_bounds = array<i64: 36, 128>}, {pipeline_mode = #tpu.pipeline_mode<synchronous>, transform_indices = @transform_2, window_bounds = array<i64: 1, 128>}, {pipeline_mode = #tpu.pipeline_mode<synchronous>, transform_indices = @transform_3, window_bounds = array<i64: 128, 128>}, {pipeline_mode = #tpu.pipeline_mode<synchronous>, transform_indices = @transform_4, window_bounds = array<i64: 1, 128>}, {transform_indices = @transform_5, window_bounds = array<i64: 128, 128>}]} {
    %cst = arith.constant 0.000000e+00 : f32
    %0 = vector.broadcast %cst : f32 to vector<128x128xf32>
    %c0 = arith.constant 0 : index
    %c0_0 = arith.constant 0 : index
    %c0_1 = arith.constant 0 : index
    %1 = vector.load %arg1[%c0, %c0_0, %c0_1] : memref<3x128x36xbf16, #tpu.memory_space<vmem>>, vector<1x128x36xbf16>
    %2 = vector.shape_cast %1 : vector<1x128x36xbf16> to vector<128x36xbf16>
    %c0_2 = arith.constant 0 : index
    %c0_3 = arith.constant 0 : index
    %3 = vector.load %arg2[%c0_2, %c0_3] : memref<36x128xbf16, #tpu.memory_space<vmem>>, vector<36x128xbf16>
    %cst_4 = arith.constant dense<0.000000e+00> : vector<128x128xf32>
    %4 = tpu.matmul %2, %3, %cst_4 {dimension_numbers = #tpu.dot_dimension_numbers<[1], [0], [0], [1], [0, 0, 1, 1], [], []>} : vector<128x36xbf16>, vector<36x128xbf16>, vector<128x128xf32> -> vector<128x128xf32>
    %c0_5 = arith.constant 0 : index
    %c0_6 = arith.constant 0 : index
    %5 = vector.load %arg3[%c0_5, %c0_6] : memref<1x128xf32, #tpu.memory_space<vmem>>, vector<1x128xf32>
    %6 = vector.broadcast %5 : vector<1x128xf32> to vector<128x128xf32>
    %7 = arith.addf %4, %6 : vector<128x128xf32>
    %8 = arith.negf %7 : vector<128x128xf32>
    %9 = math.exp %8 : vector<128x128xf32>
    %cst_7 = arith.constant 1.000000e+00 : f32
    %10 = vector.broadcast %cst_7 : f32 to vector<128x128xf32>
    %11 = arith.addf %10, %9 : vector<128x128xf32>
    %12 = arith.divf %10, %11 : vector<128x128xf32>
    %13 = arith.mulf %7, %12 : vector<128x128xf32>
    %14 = arith.truncf %13 : vector<128x128xf32> to vector<128x128xbf16>
    %c0_8 = arith.constant 0 : index
    %c0_9 = arith.constant 0 : index
    %15 = vector.load %arg4[%c0_8, %c0_9] : memref<128x128xbf16, #tpu.memory_space<vmem>>, vector<128x128xbf16>
    %cst_10 = arith.constant dense<0.000000e+00> : vector<128x128xf32>
    %16 = tpu.matmul %14, %15, %cst_10 {dimension_numbers = #tpu.dot_dimension_numbers<[1], [0], [0], [1], [0, 0, 1, 1], [], []>} : vector<128x128xbf16>, vector<128x128xbf16>, vector<128x128xf32> -> vector<128x128xf32>
    %17 = arith.addf %0, %16 : vector<128x128xf32>
    %c1 = arith.constant 1 : index
    %c0_11 = arith.constant 0 : index
    %c0_12 = arith.constant 0 : index
    %18 = vector.load %arg1[%c1, %c0_11, %c0_12] : memref<3x128x36xbf16, #tpu.memory_space<vmem>>, vector<1x128x36xbf16>
    %19 = vector.shape_cast %18 : vector<1x128x36xbf16> to vector<128x36xbf16>
    %c0_13 = arith.constant 0 : index
    %c0_14 = arith.constant 0 : index
    %20 = vector.load %arg2[%c0_13, %c0_14] : memref<36x128xbf16, #tpu.memory_space<vmem>>, vector<36x128xbf16>
    %cst_15 = arith.constant dense<0.000000e+00> : vector<128x128xf32>
    %21 = tpu.matmul %19, %20, %cst_15 {dimension_numbers = #tpu.dot_dimension_numbers<[1], [0], [0], [1], [0, 0, 1, 1], [], []>} : vector<128x36xbf16>, vector<36x128xbf16>, vector<128x128xf32> -> vector<128x128xf32>
    %c0_16 = arith.constant 0 : index
    %c0_17 = arith.constant 0 : index
    %22 = vector.load %arg3[%c0_16, %c0_17] : memref<1x128xf32, #tpu.memory_space<vmem>>, vector<1x128xf32>
    %23 = vector.broadcast %22 : vector<1x128xf32> to vector<128x128xf32>
    %24 = arith.addf %21, %23 : vector<128x128xf32>
    %25 = arith.negf %24 : vector<128x128xf32>
    %26 = math.exp %25 : vector<128x128xf32>
    %cst_18 = arith.constant 1.000000e+00 : f32
    %27 = vector.broadcast %cst_18 : f32 to vector<128x128xf32>
    %28 = arith.addf %27, %26 : vector<128x128xf32>
    %29 = arith.divf %27, %28 : vector<128x128xf32>
    %30 = arith.mulf %24, %29 : vector<128x128xf32>
    %31 = arith.truncf %30 : vector<128x128xf32> to vector<128x128xbf16>
    %c0_19 = arith.constant 0 : index
    %c0_20 = arith.constant 0 : index
    %32 = vector.load %arg4[%c0_19, %c0_20] : memref<128x128xbf16, #tpu.memory_space<vmem>>, vector<128x128xbf16>
    %cst_21 = arith.constant dense<0.000000e+00> : vector<128x128xf32>
    %33 = tpu.matmul %31, %32, %cst_21 {dimension_numbers = #tpu.dot_dimension_numbers<[1], [0], [0], [1], [0, 0, 1, 1], [], []>} : vector<128x128xbf16>, vector<128x128xbf16>, vector<128x128xf32> -> vector<128x128xf32>
    %34 = arith.addf %17, %33 : vector<128x128xf32>
    %c2 = arith.constant 2 : index
    %c0_22 = arith.constant 0 : index
    %c0_23 = arith.constant 0 : index
    %35 = vector.load %arg1[%c2, %c0_22, %c0_23] : memref<3x128x36xbf16, #tpu.memory_space<vmem>>, vector<1x128x36xbf16>
    %36 = vector.shape_cast %35 : vector<1x128x36xbf16> to vector<128x36xbf16>
    %c0_24 = arith.constant 0 : index
    %c0_25 = arith.constant 0 : index
    %37 = vector.load %arg2[%c0_24, %c0_25] : memref<36x128xbf16, #tpu.memory_space<vmem>>, vector<36x128xbf16>
    %cst_26 = arith.constant dense<0.000000e+00> : vector<128x128xf32>
    %38 = tpu.matmul %36, %37, %cst_26 {dimension_numbers = #tpu.dot_dimension_numbers<[1], [0], [0], [1], [0, 0, 1, 1], [], []>} : vector<128x36xbf16>, vector<36x128xbf16>, vector<128x128xf32> -> vector<128x128xf32>
    %c0_27 = arith.constant 0 : index
    %c0_28 = arith.constant 0 : index
    %39 = vector.load %arg3[%c0_27, %c0_28] : memref<1x128xf32, #tpu.memory_space<vmem>>, vector<1x128xf32>
    %40 = vector.broadcast %39 : vector<1x128xf32> to vector<128x128xf32>
    %41 = arith.addf %38, %40 : vector<128x128xf32>
    %42 = arith.negf %41 : vector<128x128xf32>
    %43 = math.exp %42 : vector<128x128xf32>
    %cst_29 = arith.constant 1.000000e+00 : f32
    %44 = vector.broadcast %cst_29 : f32 to vector<128x128xf32>
    %45 = arith.addf %44, %43 : vector<128x128xf32>
    %46 = arith.divf %44, %45 : vector<128x128xf32>
    %47 = arith.mulf %41, %46 : vector<128x128xf32>
    %48 = arith.truncf %47 : vector<128x128xf32> to vector<128x128xbf16>
    %c0_30 = arith.constant 0 : index
    %c0_31 = arith.constant 0 : index
    %49 = vector.load %arg4[%c0_30, %c0_31] : memref<128x128xbf16, #tpu.memory_space<vmem>>, vector<128x128xbf16>
    %cst_32 = arith.constant dense<0.000000e+00> : vector<128x128xf32>
    %50 = tpu.matmul %48, %49, %cst_32 {dimension_numbers = #tpu.dot_dimension_numbers<[1], [0], [0], [1], [0, 0, 1, 1], [], []>} : vector<128x128xbf16>, vector<128x128xbf16>, vector<128x128xf32> -> vector<128x128xf32>
    %51 = arith.addf %34, %50 : vector<128x128xf32>
    %c0_33 = arith.constant 0 : index
    %c0_34 = arith.constant 0 : index
    %52 = vector.load %arg5[%c0_33, %c0_34] : memref<1x128xf32, #tpu.memory_space<vmem>>, vector<1x128xf32>
    %53 = vector.broadcast %52 : vector<1x128xf32> to vector<128x128xf32>
    %54 = arith.addf %51, %53 : vector<128x128xf32>
    %c0_35 = arith.constant 0 : index
    %c0_36 = arith.constant 0 : index
    %55 = vector.load %arg6[%c0_35, %c0_36] : memref<128x128xf32, #tpu.memory_space<vmem>>, vector<128x128xf32>
    tpu.vector_store %arg6[%c0_35, %c0_36], %54 {strides = array<i32>} : memref<128x128xf32, #tpu.memory_space<vmem>>, vector<128x128xf32>,
    return
  }
  func.func @transform_0(%arg0: i32) -> (i32, i32, i32) {
    %c0_i32 = arith.constant 0 : i32
    %c0_i32_0 = arith.constant 0 : i32
    %c0_i32_1 = arith.constant 0 : i32
    return %c0_i32, %arg0, %c0_i32_0 : i32, i32, i32
  }
  func.func @transform_1(%arg0: i32) -> (i32, i32) {
    %c0_i32 = arith.constant 0 : i32
    %c0_i32_0 = arith.constant 0 : i32
    %c0_i32_1 = arith.constant 0 : i32
    return %c0_i32, %c0_i32_0 : i32, i32
  }
  func.func @transform_2(%arg0: i32) -> (i32, i32) {
    %c0_i32 = arith.constant 0 : i32
    %c0_i32_0 = arith.constant 0 : i32
    %c0_i32_1 = arith.constant 0 : i32
    return %c0_i32, %c0_i32_0 : i32, i32
  }
  func.func @transform_3(%arg0: i32) -> (i32, i32) {
    %c0_i32 = arith.constant 0 : i32
    %c0_i32_0 = arith.constant 0 : i32
    %c0_i32_1 = arith.constant 0 : i32
    return %c0_i32, %c0_i32_0 : i32, i32
  }
  func.func @transform_4(%arg0: i32) -> (i32, i32) {
    %c0_i32 = arith.constant 0 : i32
    %c0_i32_0 = arith.constant 0 : i32
    %c0_i32_1 = arith.constant 0 : i32
    return %c0_i32, %c0_i32_0 : i32, i32
  }
  func.func @transform_5(%arg0: i32) -> (i32, i32) {
    %c0_i32 = arith.constant 0 : i32
    %c0_i32_0 = arith.constant 0 : i32
    return %arg0, %c0_i32 : i32, i32
  }
}

</mosaic_0001>

<llo_original>
// kernel: tpu_custom_call.1
$region0: #{tpu_custom_call.1}
  #allocation0 [shape = 'u32[]', space=smem, size = 0x4, offset = 0x4, fixed_abs, tag = 'smem constant byte address 0x4 - core index']
  #allocation1 [shape = 'u32[72,128]{1,0:T(1,128)}', space=vmem, size = 0x9000, scoped, tag = 'internal scratch']
  %s0 = inlined_call_operand.vmem [shape: bf16[3,128,36], index: 0, kind: input, shape index: {}]
  %s1 = inlined_call_operand.vmem [shape: bf16[36,128], index: 1, kind: input, shape index: {}]
  %s2 = inlined_call_operand.vmem [shape: f32[1,128], index: 2, kind: input, shape index: {}]
  %s3 = inlined_call_operand.vmem [shape: bf16[128,128], index: 3, kind: input, shape index: {}]
  %s4 = inlined_call_operand.vmem [shape: f32[1,128], index: 4, kind: input, shape index: {}]
  %s5 = inlined_call_operand.hbm [shape: f32[128,128], index: 5, kind: output, shape index: {}]
  %s6 = sld [smem:[#allocation0]]
  $region30: #{tpu_custom_call.1} parent=0
    _
  %s8 = ssub.s32 1, %s6
  %s9 = scalar_select 0, %s8, %s6
  $region1: #{tpu_custom_call.1} parent=0
    #allocation2 [shape = 'u8[65536]{0}', space=vmem, size = 0x10000, scoped, tag = 'output window, operand 0, single buffered']
    #allocation3 [shape = 's32[1]{0}', space=sflag, size = 0x4, scoped, tag = 'scoped memory for tpu_custom_call.1']
    %10 = vsyncpa [#allocation3], 0
    // Predicated region
    $region2: #{tpu_custom_call.1} parent=1 // pred_check
      _
    $region3: #{tpu_custom_call.1} parent=1 // pred_check_branch
      %12 = sbr.rel (0) target = $region5
    $region4: #{tpu_custom_call.1} parent=1 // pred_region
      _
    $region5: #{tpu_custom_call.1} parent=1 // pred_fallthru
      _
    // Predicated region
    $region6: #{tpu_custom_call.1} parent=1 // pred_check
      _
    $region7: #{tpu_custom_call.1} parent=1 // pred_check_branch
      %14 = sbr.rel (0) target = $region9
    $region8: #{tpu_custom_call.1} parent=1 // pred_region
      _
    $region9: #{tpu_custom_call.1} parent=1 // pred_fallthru
      _
    // Predicated region
    $region10: #{tpu_custom_call.1} parent=1 // pred_check
      _
    $region11: #{tpu_custom_call.1} parent=1 // pred_check_branch
      %16 = sbr.rel (0) target = $region13
    $region12: #{tpu_custom_call.1} parent=1 // pred_region
      _
    $region13: #{tpu_custom_call.1} parent=1 // pred_fallthru
      _
    // Predicated region
    $region14: #{tpu_custom_call.1} parent=1 // pred_check
      _
    $region15: #{tpu_custom_call.1} parent=1 // pred_check_branch
      %18 = sbr.rel (0) target = $region17
    $region16: #{tpu_custom_call.1} parent=1 // pred_region
      _
    $region17: #{tpu_custom_call.1} parent=1 // pred_fallthru
      _
    // Predicated region
    $region18: #{tpu_custom_call.1} parent=1 // pred_check
      _
    $region19: #{tpu_custom_call.1} parent=1 // pred_check_branch
      %20 = sbr.rel (0) target = $region21
    $region20: #{tpu_custom_call.1} parent=1 // pred_region
      _
    $region21: #{tpu_custom_call.1} parent=1 // pred_fallthru
      _
    %v22 = vld [vmem:[%s0] sm:$0xf]
    %v23 = vld [vmem:[%s0 + $0x4] sm:$0xf]
    %v24 = vld [vmem:[%s0 + $0x8] sm:$0xf]
    %v25 = vld [vmem:[%s0 + $0xc] sm:$0xf]
    %v26 = vld [vmem:[%s0 + $0x10] sm:$0xf]
    %v27 = vld [vmem:[%s0 + $0x14] sm:$0xf]
    %v28 = vld [vmem:[%s0 + $0x18] sm:$0xf]
    %v29 = vld [vmem:[%s0 + $0x1c] sm:$0xf]
    %v30 = vld [vmem:[%s0 + $0x20] sm:$0xf]
    %v31 = vld [vmem:[%s0 + $0x24] sm:$0xf]
    %v32 = vld [vmem:[%s0 + $0x28] sm:$0xf]
    %v33 = vld [vmem:[%s0 + $0x2c] sm:$0xf]
    %v34 = vld [vmem:[%s0 + $0x30] sm:$0xf]
    %v35 = vld [vmem:[%s0 + $0x34] sm:$0xf]
    %v36 = vld [vmem:[%s0 + $0x38] sm:$0xf]
    %v37 = vld [vmem:[%s0 + $0x3c] sm:$0xf]
    %v38 = vld [vmem:[%s1] sm:$0xf]
    %v39 = vld [vmem:[%s1 + $0x4] sm:$0xf]
    %v40 = vld [vmem:[%s1 + $0x8] sm:$0xf]
    %v41 = vld [vmem:[%s1 + $0xc] sm:$0xf]
    %v42 = vld [vmem:[%s1 + $0x10] sm:$0x3]
    %v43 = vld [vmem:[%s2] sm:$0x1]
    %v45 = vperm.slane %v43, 0
    %v63 = vunpack.c.l.b16 %v22
    %v64 = vunpack.c.l.b16 %v23
    %v65 = vunpack.c.l.b16 %v24
    %v66 = vunpack.c.l.b16 %v25
    %v67 = vunpack.c.l.b16 %v26
    %v68 = vunpack.c.l.b16 %v27
    %v69 = vunpack.c.l.b16 %v28
    %v70 = vunpack.c.l.b16 %v29
    %v71 = vunpack.c.l.b16 %v30
    %v72 = vunpack.c.l.b16 %v31
    %v73 = vunpack.c.l.b16 %v32
    %v74 = vunpack.c.l.b16 %v33
    %v75 = vunpack.c.l.b16 %v34
    %v76 = vunpack.c.l.b16 %v35
    %v77 = vunpack.c.l.b16 %v36
    %v78 = vunpack.c.l.b16 %v37
    %v79 = vpack.c.b16 %v64, %v63
    %v80 = vpack.c.b16 %v66, %v65
    %v81 = vpack.c.b16 %v68, %v67
    %v82 = vpack.c.b16 %v70, %v69
    %v83 = vpack.c.b16 %v72, %v71
    %v84 = vpack.c.b16 %v74, %v73
    %v85 = vpack.c.b16 %v76, %v75
    %v86 = vpack.c.b16 %v78, %v77
    %v92 = vunpack.c.l.b16 %v38
    %v93 = vunpack.c.l.b16 %v39
    %v94 = vunpack.c.l.b16 %v40
    %v95 = vunpack.c.l.b16 %v41
    %v96 = vunpack.c.l.b16 %v42
    %v97 = vpack.c.b16 %v93, %v92
    %v98 = vpack.c.b16 %v95, %v94
    %v99 = vpack.c.b16 %v96, %v96
    %vm102 = vcmask 293888
    %v104 = vsel %vm102, %v79, 0
    %v107 = vsel %vm102, %v80, 0
    %v110 = vsel %vm102, %v81, 0
    %v113 = vsel %vm102, %v82, 0
    %v116 = vsel %vm102, %v83, 0
    %v119 = vsel %vm102, %v84, 0
    %v122 = vsel %vm102, %v85, 0
    %v125 = vsel %vm102, %v86, 0
    %vm127 = vcmask 1041408
    %v129 = vsel %vm127, %v99, 0
    %131 = vmatpush.bf16.msra.mxu0 0
    %132 = vmatpush.bf16.msra.mxu0 0
    %133 = vmatpush.bf16.msra.mxu0 0
    %134 = vmatpush.bf16.msra.mxu0 0
    %135 = vmatpush.bf16.msra.mxu0 0
    %136 = vmatpush.bf16.msra.mxu0 %v129
    %137 = vmatpush.bf16.msra.mxu0 %v98
    %138 = vmatpush.bf16.msra.mxu0 %v97
    %139 = vmatmul.bf16.gmra.mxu0 %v104
    %v140 = vpop.f32.mrf.mxu0
    %v141 = vadd.f32 %v45, %v140
    %v142 = vpop.f32.mrf.mxu0
    %v143 = vadd.f32 %v45, %v142
    %144 = vmatmul.bf16.gmra.mxu0 %v107
    %v145 = vpop.f32.mrf.mxu0
    %v146 = vadd.f32 %v45, %v145
    %v147 = vpop.f32.mrf.mxu0
    %v148 = vadd.f32 %v45, %v147
    %149 = vmatmul.bf16.gmra.mxu0 %v110
    %v150 = vpop.f32.mrf.mxu0
    %v151 = vadd.f32 %v45, %v150
    %v152 = vpop.f32.mrf.mxu0
    %v153 = vadd.f32 %v45, %v152
    %154 = vmatmul.bf16.gmra.mxu0 %v113
    %v155 = vpop.f32.mrf.mxu0
    %v156 = vadd.f32 %v45, %v155
    %v157 = vpop.f32.mrf.mxu0
    %v158 = vadd.f32 %v45, %v157
    %159 = vmatmul.bf16.gmra.mxu0 %v116
    %v160 = vpop.f32.mrf.mxu0
    %v161 = vadd.f32 %v45, %v160
    %v162 = vpop.f32.mrf.mxu0
    %v163 = vadd.f32 %v45, %v162
    %164 = vmatmul.bf16.gmra.mxu0 %v119
    %v165 = vpop.f32.mrf.mxu0
    %v166 = vadd.f32 %v45, %v165
    %v167 = vpop.f32.mrf.mxu0
    %v168 = vadd.f32 %v45, %v167
    %169 = vmatmul.bf16.gmra.mxu0 %v122
    %v170 = vpop.f32.mrf.mxu0
    %v171 = vadd.f32 %v45, %v170
    %v172 = vpop.f32.mrf.mxu0
    %v173 = vadd.f32 %v45, %v172
    %174 = vmatmul.bf16.gmra.mxu0 %v125
    %v175 = vpop.f32.mrf.mxu0
    %v176 = vadd.f32 %v45, %v175
    %v177 = vpop.f32.mrf.mxu0
    %v178 = vadd.f32 %v45, %v177
    %179 = vdwg.mxu0
    %v180 = vxor.u32 %v141, 2147483648
    %v181 = vxor.u32 %v143, 2147483648
    %v182 = vxor.u32 %v146, 2147483648
    %v183 = vxor.u32 %v148, 2147483648
    %v184 = vxor.u32 %v151, 2147483648
    %v185 = vxor.u32 %v153, 2147483648
    %v186 = vxor.u32 %v156, 2147483648
    %v187 = vxor.u32 %v158, 2147483648
    %v188 = vxor.u32 %v161, 2147483648
    %v189 = vxor.u32 %v163, 2147483648
    %v190 = vxor.u32 %v166, 2147483648
    %v191 = vxor.u32 %v168, 2147483648
    %v192 = vxor.u32 %v171, 2147483648
    %v193 = vxor.u32 %v173, 2147483648
    %v194 = vxor.u32 %v176, 2147483648
    %v195 = vxor.u32 %v178, 2147483648
    %v196 = vmul.f32 %v180, 1.442695
    %v197 = vpow.pop %v196
    %v198 = vmul.f32 %v181, 1.442695
    %v199 = vpow.pop %v198
    %v200 = vmul.f32 %v182, 1.442695
    %v201 = vpow.pop %v200
    %v202 = vmul.f32 %v183, 1.442695
    %v203 = vpow.pop %v202
    %v204 = vmul.f32 %v184, 1.442695
    %v205 = vpow.pop %v204
    %v206 = vmul.f32 %v185, 1.442695
    %v207 = vpow.pop %v206
    %v208 = vmul.f32 %v186, 1.442695
    %v209 = vpow.pop %v208
    %v210 = vmul.f32 %v187, 1.442695
    %v211 = vpow.pop %v210
    %v212 = vmul.f32 %v188, 1.442695
    %v213 = vpow.pop %v212
    %v214 = vmul.f32 %v189, 1.442695
    %v215 = vpow.pop %v214
    %v216 = vmul.f32 %v190, 1.442695
    %v217 = vpow.pop %v216
    %v218 = vmul.f32 %v191, 1.442695
    %v219 = vpow.pop %v218
    %v220 = vmul.f32 %v192, 1.442695
    %v221 = vpow.pop %v220
    %v222 = vmul.f32 %v193, 1.442695
    %v223 = vpow.pop %v222
    %v224 = vmul.f32 %v194, 1.442695
    %v225 = vpow.pop %v224
    %v226 = vmul.f32 %v195, 1.442695
    %v227 = vpow.pop %v226
    %v228 = vadd.f32 %v197, 1.0
    %v229 = vadd.f32 %v199, 1.0
    %v230 = vadd.f32 %v201, 1.0
    %v231 = vadd.f32 %v203, 1.0
    %v232 = vadd.f32 %v205, 1.0
    %v233 = vadd.f32 %v207, 1.0
    %v234 = vadd.f32 %v209, 1.0
    %v235 = vadd.f32 %v211, 1.0
    %v236 = vadd.f32 %v213, 1.0
    %v237 = vadd.f32 %v215, 1.0
    %v238 = vadd.f32 %v217, 1.0
    %v239 = vadd.f32 %v219, 1.0
    %v240 = vadd.f32 %v221, 1.0
    %v241 = vadd.f32 %v223, 1.0
    %v242 = vadd.f32 %v225, 1.0
    %v243 = vadd.f32 %v227, 1.0
    %v244 = vrcp.pop %v228
    %v245 = vmul.f32 %v228, %v244
    %v246 = vsub.f32 1.0, %v245
    %v247 = vmul.f32 %v244, %v246
    %v248 = vadd.f32 %v244, %v247
    %vm249 = vweird.f32 %v228
    %vm250 = vweird.f32 %v244
    %vm251 = vmor %vm249, %vm250
    %v252 = vsel %vm251, %v244, %v248
    %v253 = vand.u32 2147483647, %v228
    %vm254 = vcmp.eq.f32.partialorder %v253, 8.507059e+37
    %v255 = vand.u32 %v228, 2147483648
    %v256 = vor.u32 1.1754944e-38, %v255
    %v257 = vsel %vm254, %v256, %v252
    %v258 = vmul.f32 1.0, %v257
    %v259 = vrcp.pop %v229
    %v260 = vmul.f32 %v229, %v259
    %v261 = vsub.f32 1.0, %v260
    %v262 = vmul.f32 %v259, %v261
    %v263 = vadd.f32 %v259, %v262
    %vm264 = vweird.f32 %v229
    %vm265 = vweird.f32 %v259
    %vm266 = vmor %vm264, %vm265
    %v267 = vsel %vm266, %v259, %v263
    %v268 = vand.u32 2147483647, %v229
    %vm269 = vcmp.eq.f32.partialorder %v268, 8.507059e+37
    %v270 = vand.u32 %v229, 2147483648
    %v271 = vor.u32 1.1754944e-38, %v270
    %v272 = vsel %vm269, %v271, %v267
    %v273 = vmul.f32 1.0, %v272
    %v274 = vrcp.pop %v230
    %v275 = vmul.f32 %v230, %v274
    %v276 = vsub.f32 1.0, %v275
    %v277 = vmul.f32 %v274, %v276
    %v278 = vadd.f32 %v274, %v277
    %vm279 = vweird.f32 %v230
    %vm280 = vweird.f32 %v274
    %vm281 = vmor %vm279, %vm280
    %v282 = vsel %vm281, %v274, %v278
    %v283 = vand.u32 2147483647, %v230
    %vm284 = vcmp.eq.f32.partialorder %v283, 8.507059e+37
    %v285 = vand.u32 %v230, 2147483648
    %v286 = vor.u32 1.1754944e-38, %v285
    %v287 = vsel %vm284, %v286, %v282
    %v288 = vmul.f32 1.0, %v287
    %v289 = vrcp.pop %v231
    %v290 = vmul.f32 %v231, %v289
    %v291 = vsub.f32 1.0, %v290
    %v292 = vmul.f32 %v289, %v291
    %v293 = vadd.f32 %v289, %v292
    %vm294 = vweird.f32 %v231
    %vm295 = vweird.f32 %v289
    %vm296 = vmor %vm294, %vm295
    %v297 = vsel %vm296, %v289, %v293
    %v298 = vand.u32 2147483647, %v231
    %vm299 = vcmp.eq.f32.partialorder %v298, 8.507059e+37
    %v300 = vand.u32 %v231, 2147483648
    %v301 = vor.u32 1.1754944e-38, %v300
    %v302 = vsel %vm299, %v301, %v297
    %v303 = vmul.f32 1.0, %v302
    %v304 = vrcp.pop %v232
    %v305 = vmul.f32 %v232, %v304
    %v306 = vsub.f32 1.0, %v305
    %v307 = vmul.f32 %v304, %v306
    %v308 = vadd.f32 %v304, %v307
    %vm309 = vweird.f32 %v232
    %vm310 = vweird.f32 %v304
    %vm311 = vmor %vm309, %vm310
    %v312 = vsel %vm311, %v304, %v308
    %v313 = vand.u32 2147483647, %v232
    %vm314 = vcmp.eq.f32.partialorder %v313, 8.507059e+37
    %v315 = vand.u32 %v232, 2147483648
    %v316 = vor.u32 1.1754944e-38, %v315
    %v317 = vsel %vm314, %v316, %v312
    %v318 = vmul.f32 1.0, %v317
    %v319 = vrcp.pop %v233
    %v320 = vmul.f32 %v233, %v319
    %v321 = vsub.f32 1.0, %v320
    %v322 = vmul.f32 %v319, %v321
    %v323 = vadd.f32 %v319, %v322
    %vm324 = vweird.f32 %v233
    %vm325 = vweird.f32 %v319
    %vm326 = vmor %vm324, %vm325
    %v327 = vsel %vm326, %v319, %v323
    %v328 = vand.u32 2147483647, %v233
    %vm329 = vcmp.eq.f32.partialorder %v328, 8.507059e+37
    %v330 = vand.u32 %v233, 2147483648
    %v331 = vor.u32 1.1754944e-38, %v330
    %v332 = vsel %vm329, %v331, %v327
    %v333 = vmul.f32 1.0, %v332
    %v334 = vrcp.pop %v234
    %v335 = vmul.f32 %v234, %v334
    %v336 = vsub.f32 1.0, %v335
    %v337 = vmul.f32 %v334, %v336
    %v338 = vadd.f32 %v334, %v337
    %vm339 = vweird.f32 %v234
    %vm340 = vweird.f32 %v334
    %vm341 = vmor %vm339, %vm340
    %v342 = vsel %vm341, %v334, %v338
    %v343 = vand.u32 2147483647, %v234
    %vm344 = vcmp.eq.f32.partialorder %v343, 8.507059e+37
    %v345 = vand.u32 %v234, 2147483648
    %v346 = vor.u32 1.1754944e-38, %v345
    %v347 = vsel %vm344, %v346, %v342
    %v348 = vmul.f32 1.0, %v347
    %v349 = vrcp.pop %v235
    %v350 = vmul.f32 %v235, %v349
    %v351 = vsub.f32 1.0, %v350
    %v352 = vmul.f32 %v349, %v351
    %v353 = vadd.f32 %v349, %v352
    %vm354 = vweird.f32 %v235
    %vm355 = vweird.f32 %v349
    %vm356 = vmor %vm354, %vm355
    %v357 = vsel %vm356, %v349, %v353
    %v358 = vand.u32 2147483647, %v235
    %vm359 = vcmp.eq.f32.partialorder %v358, 8.507059e+37
    %v360 = vand.u32 %v235, 2147483648
    %v361 = vor.u32 1.1754944e-38, %v360
    %v362 = vsel %vm359, %v361, %v357
    %v363 = vmul.f32 1.0, %v362
    %v364 = vrcp.pop %v236
    %v365 = vmul.f32 %v236, %v364
    %v366 = vsub.f32 1.0, %v365
    %v367 = vmul.f32 %v364, %v366
    %v368 = vadd.f32 %v364, %v367
    %vm369 = vweird.f32 %v236
    %vm370 = vweird.f32 %v364
    %vm371 = vmor %vm369, %vm370
    %v372 = vsel %vm371, %v364, %v368
    %v373 = vand.u32 2147483647, %v236
    %vm374 = vcmp.eq.f32.partialorder %v373, 8.507059e+37
    %v375 = vand.u32 %v236, 2147483648
    %v376 = vor.u32 1.1754944e-38, %v375
    %v377 = vsel %vm374, %v376, %v372
    %v378 = vmul.f32 1.0, %v377
    %v379 = vrcp.pop %v237
    %v380 = vmul.f32 %v237, %v379
    %v381 = vsub.f32 1.0, %v380
    %v382 = vmul.f32 %v379, %v381
    %v383 = vadd.f32 %v379, %v382
    %vm384 = vweird.f32 %v237
    %vm385 = vweird.f32 %v379
    %vm386 = vmor %vm384, %vm385
    %v387 = vsel %vm386, %v379, %v383
    %v388 = vand.u32 2147483647, %v237
    %vm389 = vcmp.eq.f32.partialorder %v388, 8.507059e+37
    %v390 = vand.u32 %v237, 2147483648
    %v391 = vor.u32 1.1754944e-38, %v390
    %v392 = vsel %vm389, %v391, %v387
    %v393 = vmul.f32 1.0, %v392
    %v394 = vrcp.pop %v238
    %v395 = vmul.f32 %v238, %v394
    %v396 = vsub.f32 1.0, %v395
    %v397 = vmul.f32 %v394, %v396
    %v398 = vadd.f32 %v394, %v397
    %vm399 = vweird.f32 %v238
    %vm400 = vweird.f32 %v394
    %vm401 = vmor %vm399, %vm400
    %v402 = vsel %vm401, %v394, %v398
    %v403 = vand.u32 2147483647, %v238
    %vm404 = vcmp.eq.f32.partialorder %v403, 8.507059e+37
    %v405 = vand.u32 %v238, 2147483648
    %v406 = vor.u32 1.1754944e-38, %v405
    %v407 = vsel %vm404, %v406, %v402
    %v408 = vmul.f32 1.0, %v407
    %v409 = vrcp.pop %v239
    %v410 = vmul.f32 %v239, %v409
    %v411 = vsub.f32 1.0, %v410
    %v412 = vmul.f32 %v409, %v411
    %v413 = vadd.f32 %v409, %v412
    %vm414 = vweird.f32 %v239
    %vm415 = vweird.f32 %v409
    %vm416 = vmor %vm414, %vm415
    %v417 = vsel %vm416, %v409, %v413
    %v418 = vand.u32 2147483647, %v239
    %vm419 = vcmp.eq.f32.partialorder %v418, 8.507059e+37
    %v420 = vand.u32 %v239, 2147483648
    %v421 = vor.u32 1.1754944e-38, %v420
    %v422 = vsel %vm419, %v421, %v417
    %v423 = vmul.f32 1.0, %v422
    %v424 = vrcp.pop %v240
    %v425 = vmul.f32 %v240, %v424
    %v426 = vsub.f32 1.0, %v425
    %v427 = vmul.f32 %v424, %v426
    %v428 = vadd.f32 %v424, %v427
    %vm429 = vweird.f32 %v240
    %vm430 = vweird.f32 %v424
    %vm431 = vmor %vm429, %vm430
    %v432 = vsel %vm431, %v424, %v428
    %v433 = vand.u32 2147483647, %v240
    %vm434 = vcmp.eq.f32.partialorder %v433, 8.507059e+37
    %v435 = vand.u32 %v240, 2147483648
    %v436 = vor.u32 1.1754944e-38, %v435
    %v437 = vsel %vm434, %v436, %v432
    %v438 = vmul.f32 1.0, %v437
    %v439 = vrcp.pop %v241
    %v440 = vmul.f32 %v241, %v439
    %v441 = vsub.f32 1.0, %v440
    %v442 = vmul.f32 %v439, %v441
    %v443 = vadd.f32 %v439, %v442
    %vm444 = vweird.f32 %v241
    %vm445 = vweird.f32 %v439
    %vm446 = vmor %vm444, %vm445
    %v447 = vsel %vm446, %v439, %v443
    %v448 = vand.u32 2147483647, %v241
    %vm449 = vcmp.eq.f32.partialorder %v448, 8.507059e+37
    %v450 = vand.u32 %v241, 2147483648
    %v451 = vor.u32 1.1754944e-38, %v450
    %v452 = vsel %vm449, %v451, %v447
    %v453 = vmul.f32 1.0, %v452
    %v454 = vrcp.pop %v242
    %v455 = vmul.f32 %v242, %v454
    %v456 = vsub.f32 1.0, %v455
    %v457 = vmul.f32 %v454, %v456
    %v458 = vadd.f32 %v454, %v457
    %vm459 = vweird.f32 %v242
    %vm460 = vweird.f32 %v454
    %vm461 = vmor %vm459, %vm460
    %v462 = vsel %vm461, %v454, %v458
    %v463 = vand.u32 2147483647, %v242
    %vm464 = vcmp.eq.f32.partialorder %v463, 8.507059e+37
    %v465 = vand.u32 %v242, 2147483648
    %v466 = vor.u32 1.1754944e-38, %v465
    %v467 = vsel %vm464, %v466, %v462
    %v468 = vmul.f32 1.0, %v467
    %v469 = vrcp.pop %v243
    %v470 = vmul.f32 %v243, %v469
    %v471 = vsub.f32 1.0, %v470
    %v472 = vmul.f32 %v469, %v471
    %v473 = vadd.f32 %v469, %v472
    %vm474 = vweird.f32 %v243
    %vm475 = vweird.f32 %v469
    %vm476 = vmor %vm474, %vm475
    %v477 = vsel %vm476, %v469, %v473
    %v478 = vand.u32 2147483647, %v243
    %vm479 = vcmp.eq.f32.partialorder %v478, 8.507059e+37
    %v480 = vand.u32 %v243, 2147483648
    %v481 = vor.u32 1.1754944e-38, %v480
    %v482 = vsel %vm479, %v481, %v477
    %v483 = vmul.f32 1.0, %v482
    %v484 = vmul.f32 %v141, %v258
    %v485 = vmul.f32 %v143, %v273
    %v486 = vmul.f32 %v146, %v288
    %v487 = vmul.f32 %v148, %v303
    %v488 = vmul.f32 %v151, %v318
    %v489 = vmul.f32 %v153, %v333
    %v490 = vmul.f32 %v156, %v348
    %v491 = vmul.f32 %v158, %v363
    %v492 = vmul.f32 %v161, %v378
    %v493 = vmul.f32 %v163, %v393
    %v494 = vmul.f32 %v166, %v408
    %v495 = vmul.f32 %v168, %v423
    %v496 = vmul.f32 %v171, %v438
    %v497 = vmul.f32 %v173, %v453
    %v498 = vmul.f32 %v176, %v468
    %v499 = vmul.f32 %v178, %v483
    %v500 = vpack.c.bf16 %v485, %v484
    %v501 = vpack.c.bf16 %v487, %v486
    %v502 = vpack.c.bf16 %v489, %v488
    %v503 = vpack.c.bf16 %v491, %v490
    %v504 = vpack.c.bf16 %v493, %v492
    %v505 = vpack.c.bf16 %v495, %v494
    %v506 = vpack.c.bf16 %v497, %v496
    %v507 = vpack.c.bf16 %v499, %v498
    %v508 = vld [vmem:[%s3] sm:$0xf]
    %v509 = vld [vmem:[%s3 + $0x4] sm:$0xf]
    %v510 = vld [vmem:[%s3 + $0x8] sm:$0xf]
    %v511 = vld [vmem:[%s3 + $0xc] sm:$0xf]
    %v512 = vld [vmem:[%s3 + $0x10] sm:$0xf]
    %v513 = vld [vmem:[%s3 + $0x14] sm:$0xf]
    %v514 = vld [vmem:[%s3 + $0x18] sm:$0xf]
    %v515 = vld [vmem:[%s3 + $0x1c] sm:$0xf]
    %v516 = vld [vmem:[%s3 + $0x20] sm:$0xf]
    %v517 = vld [vmem:[%s3 + $0x24] sm:$0xf]
    %v518 = vld [vmem:[%s3 + $0x28] sm:$0xf]
    %v519 = vld [vmem:[%s3 + $0x2c] sm:$0xf]
    %v520 = vld [vmem:[%s3 + $0x30] sm:$0xf]
    %v521 = vld [vmem:[%s3 + $0x34] sm:$0xf]
    %v522 = vld [vmem:[%s3 + $0x38] sm:$0xf]
    %v523 = vld [vmem:[%s3 + $0x3c] sm:$0xf]
    %s524 = scalar_lea.vmem %s0, 64
    %v525 = vld [vmem:[%s524] sm:$0xf]
    %v526 = vld [vmem:[%s524 + $0x4] sm:$0xf]
    %v527 = vld [vmem:[%s524 + $0x8] sm:$0xf]
    %v528 = vld [vmem:[%s524 + $0xc] sm:$0xf]
    %v529 = vld [vmem:[%s524 + $0x10] sm:$0xf]
    %v530 = vld [vmem:[%s524 + $0x14] sm:$0xf]
    %v531 = vld [vmem:[%s524 + $0x18] sm:$0xf]
    %v532 = vld [vmem:[%s524 + $0x1c] sm:$0xf]
    %v533 = vld [vmem:[%s524 + $0x20] sm:$0xf]
    %v534 = vld [vmem:[%s524 + $0x24] sm:$0xf]
    %v535 = vld [vmem:[%s524 + $0x28] sm:$0xf]
    %v536 = vld [vmem:[%s524 + $0x2c] sm:$0xf]
    %v537 = vld [vmem:[%s524 + $0x30] sm:$0xf]
    %v538 = vld [vmem:[%s524 + $0x34] sm:$0xf]
    %v539 = vld [vmem:[%s524 + $0x38] sm:$0xf]
    %v540 = vld [vmem:[%s524 + $0x3c] sm:$0xf]
    %v557 = vunpack.c.l.b16 %v525
    %v558 = vunpack.c.l.b16 %v526
    %v559 = vunpack.c.l.b16 %v527
    %v560 = vunpack.c.l.b16 %v528
    %v561 = vunpack.c.l.b16 %v529
    %v562 = vunpack.c.l.b16 %v530
    %v563 = vunpack.c.l.b16 %v531
    %v564 = vunpack.c.l.b16 %v532
    %v565 = vunpack.c.l.b16 %v533
    %v566 = vunpack.c.l.b16 %v534
    %v567 = vunpack.c.l.b16 %v535
    %v568 = vunpack.c.l.b16 %v536
    %v569 = vunpack.c.l.b16 %v537
    %v570 = vunpack.c.l.b16 %v538
    %v571 = vunpack.c.l.b16 %v539
    %v572 = vunpack.c.l.b16 %v540
    %v573 = vpack.c.b16 %v558, %v557
    %v574 = vpack.c.b16 %v560, %v559
    %v575 = vpack.c.b16 %v562, %v561
    %v576 = vpack.c.b16 %v564, %v563
    %v577 = vpack.c.b16 %v566, %v565
    %v578 = vpack.c.b16 %v568, %v567
    %v579 = vpack.c.b16 %v570, %v569
    %v580 = vpack.c.b16 %v572, %v571
    %v582 = vsel %vm102, %v573, 0
    %v585 = vsel %vm102, %v574, 0
    %v588 = vsel %vm102, %v575, 0
    %v591 = vsel %vm102, %v576, 0
    %v594 = vsel %vm102, %v577, 0
    %v597 = vsel %vm102, %v578, 0
    %v600 = vsel %vm102, %v579, 0
    %v603 = vsel %vm102, %v580, 0
    %605 = vmatpush.bf16.msra.mxu0 0
    %606 = vmatpush.bf16.msra.mxu0 0
    %607 = vmatpush.bf16.msra.mxu0 0
    %608 = vmatpush.bf16.msra.mxu0 0
    %609 = vmatpush.bf16.msra.mxu0 0
    %610 = vmatpush.bf16.msra.mxu0 %v129
    %611 = vmatpush.bf16.msra.mxu0 %v98
    %612 = vmatpush.bf16.msra.mxu0 %v97
    %613 = vmatmul.bf16.gmra.mxu0 %v582
    %v614 = vpop.f32.mrf.mxu0
    %v615 = vadd.f32 %v45, %v614
    %v616 = vpop.f32.mrf.mxu0
    %v617 = vadd.f32 %v45, %v616
    %618 = vmatmul.bf16.gmra.mxu0 %v585
    %v619 = vpop.f32.mrf.mxu0
    %v620 = vadd.f32 %v45, %v619
    %v621 = vpop.f32.mrf.mxu0
    %v622 = vadd.f32 %v45, %v621
    %623 = vmatmul.bf16.gmra.mxu0 %v588
    %v624 = vpop.f32.mrf.mxu0
    %v625 = vadd.f32 %v45, %v624
    %v626 = vpop.f32.mrf.mxu0
    %v627 = vadd.f32 %v45, %v626
    %628 = vmatmul.bf16.gmra.mxu0 %v591
    %v629 = vpop.f32.mrf.mxu0
    %v630 = vadd.f32 %v45, %v629
    %v631 = vpop.f32.mrf.mxu0
    %v632 = vadd.f32 %v45, %v631
    %633 = vmatmul.bf16.gmra.mxu0 %v594
    %v634 = vpop.f32.mrf.mxu0
    %v635 = vadd.f32 %v45, %v634
    %v636 = vpop.f32.mrf.mxu0
    %v637 = vadd.f32 %v45, %v636
    %638 = vmatmul.bf16.gmra.mxu0 %v597
    %v639 = vpop.f32.mrf.mxu0
    %v640 = vadd.f32 %v45, %v639
    %v641 = vpop.f32.mrf.mxu0
    %v642 = vadd.f32 %v45, %v641
    %643 = vmatmul.bf16.gmra.mxu0 %v600
    %v644 = vpop.f32.mrf.mxu0
    %v645 = vadd.f32 %v45, %v644
    %v646 = vpop.f32.mrf.mxu0
    %v647 = vadd.f32 %v45, %v646
    %648 = vmatmul.bf16.gmra.mxu0 %v603
    %v649 = vpop.f32.mrf.mxu0
    %v650 = vadd.f32 %v45, %v649
    %v651 = vpop.f32.mrf.mxu0
    %v652 = vadd.f32 %v45, %v651
    %653 = vdwg.mxu0
    %v654 = vxor.u32 %v615, 2147483648
    %v655 = vxor.u32 %v617, 2147483648
    %v656 = vxor.u32 %v620, 2147483648
    %v657 = vxor.u32 %v622, 2147483648
    %v658 = vxor.u32 %v625, 2147483648
    %v659 = vxor.u32 %v627, 2147483648
    %v660 = vxor.u32 %v630, 2147483648
    %v661 = vxor.u32 %v632, 2147483648
    %v662 = vxor.u32 %v635, 2147483648
    %v663 = vxor.u32 %v637, 2147483648
    %v664 = vxor.u32 %v640, 2147483648
    %v665 = vxor.u32 %v642, 2147483648
    %v666 = vxor.u32 %v645, 2147483648
    %v667 = vxor.u32 %v647, 2147483648
    %v668 = vxor.u32 %v650, 2147483648
    %v669 = vxor.u32 %v652, 2147483648
    %v670 = vmul.f32 %v654, 1.442695
    %v671 = vpow.pop %v670
    %v672 = vmul.f32 %v655, 1.442695
    %v673 = vpow.pop %v672
    %v674 = vmul.f32 %v656, 1.442695
    %v675 = vpow.pop %v674
    %v676 = vmul.f32 %v657, 1.442695
    %v677 = vpow.pop %v676
    %v678 = vmul.f32 %v658, 1.442695
    %v679 = vpow.pop %v678
    %v680 = vmul.f32 %v659, 1.442695
    %v681 = vpow.pop %v680
    %v682 = vmul.f32 %v660, 1.442695
    %v683 = vpow.pop %v682
    %v684 = vmul.f32 %v661, 1.442695
    %v685 = vpow.pop %v684
    %v686 = vmul.f32 %v662, 1.442695
    %v687 = vpow.pop %v686
    %v688 = vmul.f32 %v663, 1.442695
    %v689 = vpow.pop %v688
    %v690 = vmul.f32 %v664, 1.442695
    %v691 = vpow.pop %v690
    %v692 = vmul.f32 %v665, 1.442695
    %v693 = vpow.pop %v692
    %v694 = vmul.f32 %v666, 1.442695
    %v695 = vpow.pop %v694
    %v696 = vmul.f32 %v667, 1.442695
    %v697 = vpow.pop %v696
    %v698 = vmul.f32 %v668, 1.442695
    %v699 = vpow.pop %v698
    %v700 = vmul.f32 %v669, 1.442695
    %v701 = vpow.pop %v700
    %v702 = vadd.f32 %v671, 1.0
    %v703 = vadd.f32 %v673, 1.0
    %v704 = vadd.f32 %v675, 1.0
    %v705 = vadd.f32 %v677, 1.0
    %v706 = vadd.f32 %v679, 1.0
    %v707 = vadd.f32 %v681, 1.0
    %v708 = vadd.f32 %v683, 1.0
    %v709 = vadd.f32 %v685, 1.0
    %v710 = vadd.f32 %v687, 1.0
    %v711 = vadd.f32 %v689, 1.0
    %v712 = vadd.f32 %v691, 1.0
    %v713 = vadd.f32 %v693, 1.0
    %v714 = vadd.f32 %v695, 1.0
    %v715 = vadd.f32 %v697, 1.0
    %v716 = vadd.f32 %v699, 1.0
    %v717 = vadd.f32 %v701, 1.0
    %v718 = vrcp.pop %v702
    %v719 = vmul.f32 %v702, %v718
    %v720 = vsub.f32 1.0, %v719
    %v721 = vmul.f32 %v718, %v720
    %v722 = vadd.f32 %v718, %v721
    %vm723 = vweird.f32 %v702
    %vm724 = vweird.f32 %v718
    %vm725 = vmor %vm723, %vm724
    %v726 = vsel %vm725, %v718, %v722
    %v727 = vand.u32 2147483647, %v702
    %vm728 = vcmp.eq.f32.partialorder %v727, 8.507059e+37
    %v729 = vand.u32 %v702, 2147483648
    %v730 = vor.u32 1.1754944e-38, %v729
    %v731 = vsel %vm728, %v730, %v726
    %v732 = vmul.f32 1.0, %v731
    %v733 = vrcp.pop %v703
    %v734 = vmul.f32 %v703, %v733
    %v735 = vsub.f32 1.0, %v734
    %v736 = vmul.f32 %v733, %v735
    %v737 = vadd.f32 %v733, %v736
    %vm738 = vweird.f32 %v703
    %vm739 = vweird.f32 %v733
    %vm740 = vmor %vm738, %vm739
    %v741 = vsel %vm740, %v733, %v737
    %v742 = vand.u32 2147483647, %v703
    %vm743 = vcmp.eq.f32.partialorder %v742, 8.507059e+37
    %v744 = vand.u32 %v703, 2147483648
    %v745 = vor.u32 1.1754944e-38, %v744
    %v746 = vsel %vm743, %v745, %v741
    %v747 = vmul.f32 1.0, %v746
    %v748 = vrcp.pop %v704
    %v749 = vmul.f32 %v704, %v748
    %v750 = vsub.f32 1.0, %v749
    %v751 = vmul.f32 %v748, %v750
    %v752 = vadd.f32 %v748, %v751
    %vm753 = vweird.f32 %v704
    %vm754 = vweird.f32 %v748
    %vm755 = vmor %vm753, %vm754
    %v756 = vsel %vm755, %v748, %v752
    %v757 = vand.u32 2147483647, %v704
    %vm758 = vcmp.eq.f32.partialorder %v757, 8.507059e+37
    %v759 = vand.u32 %v704, 2147483648
    %v760 = vor.u32 1.1754944e-38, %v759
    %v761 = vsel %vm758, %v760, %v756
    %v762 = vmul.f32 1.0, %v761
    %v763 = vrcp.pop %v705
    %v764 = vmul.f32 %v705, %v763
    %v765 = vsub.f32 1.0, %v764
    %v766 = vmul.f32 %v763, %v765
    %v767 = vadd.f32 %v763, %v766
    %vm768 = vweird.f32 %v705
    %vm769 = vweird.f32 %v763
    %vm770 = vmor %vm768, %vm769
    %v771 = vsel %vm770, %v763, %v767
    %v772 = vand.u32 2147483647, %v705
    %vm773 = vcmp.eq.f32.partialorder %v772, 8.507059e+37
    %v774 = vand.u32 %v705, 2147483648
    %v775 = vor.u32 1.1754944e-38, %v774
    %v776 = vsel %vm773, %v775, %v771
    %v777 = vmul.f32 1.0, %v776
    %v778 = vrcp.pop %v706
    %v779 = vmul.f32 %v706, %v778
    %v780 = vsub.f32 1.0, %v779
    %v781 = vmul.f32 %v778, %v780
    %v782 = vadd.f32 %v778, %v781
    %vm783 = vweird.f32 %v706
    %vm784 = vweird.f32 %v778
    %vm785 = vmor %vm783, %vm784
    %v786 = vsel %vm785, %v778, %v782
    %v787 = vand.u32 2147483647, %v706
    %vm788 = vcmp.eq.f32.partialorder %v787, 8.507059e+37
    %v789 = vand.u32 %v706, 2147483648
    %v790 = vor.u32 1.1754944e-38, %v789
    %v791 = vsel %vm788, %v790, %v786
    %v792 = vmul.f32 1.0, %v791
    %v793 = vrcp.pop %v707
    %v794 = vmul.f32 %v707, %v793
    %v795 = vsub.f32 1.0, %v794
    %v796 = vmul.f32 %v793, %v795
    %v797 = vadd.f32 %v793, %v796
    %vm798 = vweird.f32 %v707
    %vm799 = vweird.f32 %v793
    %vm800 = vmor %vm798, %vm799
    %v801 = vsel %vm800, %v793, %v797
    %v802 = vand.u32 2147483647, %v707
    %vm803 = vcmp.eq.f32.partialorder %v802, 8.507059e+37
    %v804 = vand.u32 %v707, 2147483648
    %v805 = vor.u32 1.1754944e-38, %v804
    %v806 = vsel %vm803, %v805, %v801
    %v807 = vmul.f32 1.0, %v806
    %v808 = vrcp.pop %v708
    %v809 = vmul.f32 %v708, %v808
    %v810 = vsub.f32 1.0, %v809
    %v811 = vmul.f32 %v808, %v810
    %v812 = vadd.f32 %v808, %v811
    %vm813 = vweird.f32 %v708
    %vm814 = vweird.f32 %v808
    %vm815 = vmor %vm813, %vm814
    %v816 = vsel %vm815, %v808, %v812
    %v817 = vand.u32 2147483647, %v708
    %vm818 = vcmp.eq.f32.partialorder %v817, 8.507059e+37
    %v819 = vand.u32 %v708, 2147483648
    %v820 = vor.u32 1.1754944e-38, %v819
    %v821 = vsel %vm818, %v820, %v816
    %v822 = vmul.f32 1.0, %v821
    %v823 = vrcp.pop %v709
    %v824 = vmul.f32 %v709, %v823
    %v825 = vsub.f32 1.0, %v824
    %v826 = vmul.f32 %v823, %v825
    %v827 = vadd.f32 %v823, %v826
    %vm828 = vweird.f32 %v709
    %vm829 = vweird.f32 %v823
    %vm830 = vmor %vm828, %vm829
    %v831 = vsel %vm830, %v823, %v827
    %v832 = vand.u32 2147483647, %v709
    %vm833 = vcmp.eq.f32.partialorder %v832, 8.507059e+37
    %v834 = vand.u32 %v709, 2147483648
    %v835 = vor.u32 1.1754944e-38, %v834
    %v836 = vsel %vm833, %v835, %v831
    %v837 = vmul.f32 1.0, %v836
    %v838 = vrcp.pop %v710
    %v839 = vmul.f32 %v710, %v838
    %v840 = vsub.f32 1.0, %v839
    %v841 = vmul.f32 %v838, %v840
    %v842 = vadd.f32 %v838, %v841
    %vm843 = vweird.f32 %v710
    %vm844 = vweird.f32 %v838
    %vm845 = vmor %vm843, %vm844
    %v846 = vsel %vm845, %v838, %v842
    %v847 = vand.u32 2147483647, %v710
    %vm848 = vcmp.eq.f32.partialorder %v847, 8.507059e+37
    %v849 = vand.u32 %v710, 2147483648
    %v850 = vor.u32 1.1754944e-38, %v849
    %v851 = vsel %vm848, %v850, %v846
    %v852 = vmul.f32 1.0, %v851
    %v853 = vrcp.pop %v711
    %v854 = vmul.f32 %v711, %v853
    %v855 = vsub.f32 1.0, %v854
    %v856 = vmul.f32 %v853, %v855
    %v857 = vadd.f32 %v853, %v856
    %vm858 = vweird.f32 %v711
    %vm859 = vweird.f32 %v853
    %vm860 = vmor %vm858, %vm859
    %v861 = vsel %vm860, %v853, %v857
    %v862 = vand.u32 2147483647, %v711
    %vm863 = vcmp.eq.f32.partialorder %v862, 8.507059e+37
    %v864 = vand.u32 %v711, 2147483648
    %v865 = vor.u32 1.1754944e-38, %v864
    %v866 = vsel %vm863, %v865, %v861
    %v867 = vmul.f32 1.0, %v866
    %v868 = vrcp.pop %v712
    %v869 = vmul.f32 %v712, %v868
    %v870 = vsub.f32 1.0, %v869
    %v871 = vmul.f32 %v868, %v870
    %v872 = vadd.f32 %v868, %v871
    %vm873 = vweird.f32 %v712
    %vm874 = vweird.f32 %v868
    %vm875 = vmor %vm873, %vm874
    %v876 = vsel %vm875, %v868, %v872
    %v877 = vand.u32 2147483647, %v712
    %vm878 = vcmp.eq.f32.partialorder %v877, 8.507059e+37
    %v879 = vand.u32 %v712, 2147483648
    %v880 = vor.u32 1.1754944e-38, %v879
    %v881 = vsel %vm878, %v880, %v876
    %v882 = vmul.f32 1.0, %v881
    %v883 = vrcp.pop %v713
    %v884 = vmul.f32 %v713, %v883
    %v885 = vsub.f32 1.0, %v884
    %v886 = vmul.f32 %v883, %v885
    %v887 = vadd.f32 %v883, %v886
    %vm888 = vweird.f32 %v713
    %vm889 = vweird.f32 %v883
    %vm890 = vmor %vm888, %vm889
    %v891 = vsel %vm890, %v883, %v887
    %v892 = vand.u32 2147483647, %v713
    %vm893 = vcmp.eq.f32.partialorder %v892, 8.507059e+37
    %v894 = vand.u32 %v713, 2147483648
    %v895 = vor.u32 1.1754944e-38, %v894
    %v896 = vsel %vm893, %v895, %v891
    %v897 = vmul.f32 1.0, %v896
    %v898 = vrcp.pop %v714
    %v899 = vmul.f32 %v714, %v898
    %v900 = vsub.f32 1.0, %v899
    %v901 = vmul.f32 %v898, %v900
    %v902 = vadd.f32 %v898, %v901
    %vm903 = vweird.f32 %v714
    %vm904 = vweird.f32 %v898
    %vm905 = vmor %vm903, %vm904
    %v906 = vsel %vm905, %v898, %v902
    %v907 = vand.u32 2147483647, %v714
    %vm908 = vcmp.eq.f32.partialorder %v907, 8.507059e+37
    %v909 = vand.u32 %v714, 2147483648
    %v910 = vor.u32 1.1754944e-38, %v909
    %v911 = vsel %vm908, %v910, %v906
    %v912 = vmul.f32 1.0, %v911
    %v913 = vrcp.pop %v715
    %v914 = vmul.f32 %v715, %v913
    %v915 = vsub.f32 1.0, %v914
    %v916 = vmul.f32 %v913, %v915
    %v917 = vadd.f32 %v913, %v916
    %vm918 = vweird.f32 %v715
    %vm919 = vweird.f32 %v913
    %vm920 = vmor %vm918, %vm919
    %v921 = vsel %vm920, %v913, %v917
    %v922 = vand.u32 2147483647, %v715
    %vm923 = vcmp.eq.f32.partialorder %v922, 8.507059e+37
    %v924 = vand.u32 %v715, 2147483648
    %v925 = vor.u32 1.1754944e-38, %v924
    %v926 = vsel %vm923, %v925, %v921
    %v927 = vmul.f32 1.0, %v926
    %v928 = vrcp.pop %v716
    %v929 = vmul.f32 %v716, %v928
    %v930 = vsub.f32 1.0, %v929
    %v931 = vmul.f32 %v928, %v930
    %v932 = vadd.f32 %v928, %v931
    %vm933 = vweird.f32 %v716
    %vm934 = vweird.f32 %v928
    %vm935 = vmor %vm933, %vm934
    %v936 = vsel %vm935, %v928, %v932
    %v937 = vand.u32 2147483647, %v716
    %vm938 = vcmp.eq.f32.partialorder %v937, 8.507059e+37
    %v939 = vand.u32 %v716, 2147483648
    %v940 = vor.u32 1.1754944e-38, %v939
    %v941 = vsel %vm938, %v940, %v936
    %v942 = vmul.f32 1.0, %v941
    %v943 = vrcp.pop %v717
    %v944 = vmul.f32 %v717, %v943
    %v945 = vsub.f32 1.0, %v944
    %v946 = vmul.f32 %v943, %v945
    %v947 = vadd.f32 %v943, %v946
    %vm948 = vweird.f32 %v717
    %vm949 = vweird.f32 %v943
    %vm950 = vmor %vm948, %vm949
    %v951 = vsel %vm950, %v943, %v947
    %v952 = vand.u32 2147483647, %v717
    %vm953 = vcmp.eq.f32.partialorder %v952, 8.507059e+37
    %v954 = vand.u32 %v717, 2147483648
    %v955 = vor.u32 1.1754944e-38, %v954
    %v956 = vsel %vm953, %v955, %v951
    %v957 = vmul.f32 1.0, %v956
    %v958 = vmul.f32 %v615, %v732
    %v959 = vmul.f32 %v617, %v747
    %v960 = vmul.f32 %v620, %v762
    %v961 = vmul.f32 %v622, %v777
    %v962 = vmul.f32 %v625, %v792
    %v963 = vmul.f32 %v627, %v807
    %v964 = vmul.f32 %v630, %v822
    %v965 = vmul.f32 %v632, %v837
    %v966 = vmul.f32 %v635, %v852
    %v967 = vmul.f32 %v637, %v867
    %v968 = vmul.f32 %v640, %v882
    %v969 = vmul.f32 %v642, %v897
    %v970 = vmul.f32 %v645, %v912
    %v971 = vmul.f32 %v647, %v927
    %v972 = vmul.f32 %v650, %v942
    %v973 = vmul.f32 %v652, %v957
    %v974 = vpack.c.bf16 %v959, %v958
    %v975 = vpack.c.bf16 %v961, %v960
    %v976 = vpack.c.bf16 %v963, %v962
    %v977 = vpack.c.bf16 %v965, %v964
    %v978 = vpack.c.bf16 %v967, %v966
    %v979 = vpack.c.bf16 %v969, %v968
    %v980 = vpack.c.bf16 %v971, %v970
    %v981 = vpack.c.bf16 %v973, %v972
    %v998 = vunpack.c.l.b16 %v508
    %v999 = vunpack.c.l.b16 %v509
    %v1000 = vunpack.c.l.b16 %v510
    %v1001 = vunpack.c.l.b16 %v511
    %v1002 = vunpack.c.l.b16 %v512
    %v1003 = vunpack.c.l.b16 %v513
    %v1004 = vunpack.c.l.b16 %v514
    %v1005 = vunpack.c.l.b16 %v515
    %v1006 = vunpack.c.l.b16 %v516
    %v1007 = vunpack.c.l.b16 %v517
    %v1008 = vunpack.c.l.b16 %v518
    %v1009 = vunpack.c.l.b16 %v519
    %v1010 = vunpack.c.l.b16 %v520
    %v1011 = vunpack.c.l.b16 %v521
    %v1012 = vunpack.c.l.b16 %v522
    %v1013 = vunpack.c.l.b16 %v523
    %v1014 = vpack.c.b16 %v999, %v998
    %v1015 = vpack.c.b16 %v1001, %v1000
    %v1016 = vpack.c.b16 %v1003, %v1002
    %v1017 = vpack.c.b16 %v1005, %v1004
    %v1018 = vpack.c.b16 %v1007, %v1006
    %v1019 = vpack.c.b16 %v1009, %v1008
    %v1020 = vpack.c.b16 %v1011, %v1010
    %v1021 = vpack.c.b16 %v1013, %v1012
    %1030 = vmatpush.bf16.msra.mxu0 %v1021
    %1031 = vmatpush.bf16.msra.mxu0 %v1020
    %1032 = vmatpush.bf16.msra.mxu0 %v1019
    %1033 = vmatpush.bf16.msra.mxu0 %v1018
    %1034 = vmatpush.bf16.msra.mxu0 %v1017
    %1035 = vmatpush.bf16.msra.mxu0 %v1016
    %1036 = vmatpush.bf16.msra.mxu0 %v1015
    %1037 = vmatpush.bf16.msra.mxu0 %v1014
    %1038 = vmatmul.bf16.gmra.mxu0 %v974
    %v1039 = vpop.f32.mrf.mxu0
    %v1040 = vadd.f32 0.0, %v1039
    %v1041 = vpop.f32.mrf.mxu0
    %v1042 = vadd.f32 0.0, %v1041
    %1043 = vmatmul.bf16.gmra.mxu0 %v975
    %v1044 = vpop.f32.mrf.mxu0
    %v1045 = vadd.f32 0.0, %v1044
    %v1046 = vpop.f32.mrf.mxu0
    %v1047 = vadd.f32 0.0, %v1046
    %1048 = vmatmul.bf16.gmra.mxu0 %v976
    %v1049 = vpop.f32.mrf.mxu0
    %v1050 = vadd.f32 0.0, %v1049
    %v1051 = vpop.f32.mrf.mxu0
    %v1052 = vadd.f32 0.0, %v1051
    %1053 = vmatmul.bf16.gmra.mxu0 %v977
    %v1054 = vpop.f32.mrf.mxu0
    %v1055 = vadd.f32 0.0, %v1054
    %v1056 = vpop.f32.mrf.mxu0
    %v1057 = vadd.f32 0.0, %v1056
    %1058 = vmatmul.bf16.gmra.mxu0 %v978
    %v1059 = vpop.f32.mrf.mxu0
    %v1060 = vadd.f32 0.0, %v1059
    %v1061 = vpop.f32.mrf.mxu0
    %v1062 = vadd.f32 0.0, %v1061
    %1063 = vmatmul.bf16.gmra.mxu0 %v979
    %v1064 = vpop.f32.mrf.mxu0
    %v1065 = vadd.f32 0.0, %v1064
    %v1066 = vpop.f32.mrf.mxu0
    %v1067 = vadd.f32 0.0, %v1066
    %1068 = vmatmul.bf16.gmra.mxu0 %v980
    %v1069 = vpop.f32.mrf.mxu0
    %v1070 = vadd.f32 0.0, %v1069
    %v1071 = vpop.f32.mrf.mxu0
    %v1072 = vadd.f32 0.0, %v1071
    %1073 = vmatmul.bf16.gmra.mxu0 %v981
    %v1074 = vpop.f32.mrf.mxu0
    %v1075 = vadd.f32 0.0, %v1074
    %v1076 = vpop.f32.mrf.mxu0
    %v1077 = vadd.f32 0.0, %v1076
    %1078 = vdwg.mxu0
    %1079 = vmatpush.bf16.msra.mxu0 %v1021
    %1080 = vmatpush.bf16.msra.mxu0 %v1020
    %1081 = vmatpush.bf16.msra.mxu0 %v1019
    %1082 = vmatpush.bf16.msra.mxu0 %v1018
    %1083 = vmatpush.bf16.msra.mxu0 %v1017
    %1084 = vmatpush.bf16.msra.mxu0 %v1016
    %1085 = vmatpush.bf16.msra.mxu0 %v1015
    %1086 = vmatpush.bf16.msra.mxu0 %v1014
    %1087 = vmatmul.bf16.gmra.mxu0 %v500
    %v1088 = vpop.f32.mrf.mxu0
    %v1089 = vadd.f32 %v1040, %v1088
    %v1090 = vpop.f32.mrf.mxu0
    %v1091 = vadd.f32 %v1042, %v1090
    %1092 = vmatmul.bf16.gmra.mxu0 %v501
    %v1093 = vpop.f32.mrf.mxu0
    %v1094 = vadd.f32 %v1045, %v1093
    %v1095 = vpop.f32.mrf.mxu0
    %v1096 = vadd.f32 %v1047, %v1095
    %1097 = vmatmul.bf16.gmra.mxu0 %v502
    %v1098 = vpop.f32.mrf.mxu0
    %v1099 = vadd.f32 %v1050, %v1098
    %v1100 = vpop.f32.mrf.mxu0
    %v1101 = vadd.f32 %v1052, %v1100
    %1102 = vmatmul.bf16.gmra.mxu0 %v503
    %v1103 = vpop.f32.mrf.mxu0
    %v1104 = vadd.f32 %v1055, %v1103
    %v1105 = vpop.f32.mrf.mxu0
    %v1106 = vadd.f32 %v1057, %v1105
    %1107 = vmatmul.bf16.gmra.mxu0 %v504
    %v1108 = vpop.f32.mrf.mxu0
    %v1109 = vadd.f32 %v1060, %v1108
    %v1110 = vpop.f32.mrf.mxu0
    %v1111 = vadd.f32 %v1062, %v1110
    %1112 = vmatmul.bf16.gmra.mxu0 %v505
    %v1113 = vpop.f32.mrf.mxu0
    %v1114 = vadd.f32 %v1065, %v1113
    %v1115 = vpop.f32.mrf.mxu0
    %v1116 = vadd.f32 %v1067, %v1115
    %1117 = vmatmul.bf16.gmra.mxu0 %v506
    %v1118 = vpop.f32.mrf.mxu0
    %v1119 = vadd.f32 %v1070, %v1118
    %v1120 = vpop.f32.mrf.mxu0
    %v1121 = vadd.f32 %v1072, %v1120
    %1122 = vmatmul.bf16.gmra.mxu0 %v507
    %v1123 = vpop.f32.mrf.mxu0
    %v1124 = vadd.f32 %v1075, %v1123
    %v1125 = vpop.f32.mrf.mxu0
    %v1126 = vadd.f32 %v1077, %v1125
    %1127 = vdwg.mxu0
    %s1128 = scalar_lea.vmem %s0, 128
    %v1129 = vld [vmem:[%s1128] sm:$0xf]
    %v1130 = vld [vmem:[%s1128 + $0x4] sm:$0xf]
    %v1131 = vld [vmem:[%s1128 + $0x8] sm:$0xf]
    %v1132 = vld [vmem:[%s1128 + $0xc] sm:$0xf]
    %v1133 = vld [vmem:[%s1128 + $0x10] sm:$0xf]
    %v1134 = vld [vmem:[%s1128 + $0x14] sm:$0xf]
    %v1135 = vld [vmem:[%s1128 + $0x18] sm:$0xf]
    %v1136 = vld [vmem:[%s1128 + $0x1c] sm:$0xf]
    %v1137 = vld [vmem:[%s1128 + $0x20] sm:$0xf]
    %v1138 = vld [vmem:[%s1128 + $0x24] sm:$0xf]
    %v1139 = vld [vmem:[%s1128 + $0x28] sm:$0xf]
    %v1140 = vld [vmem:[%s1128 + $0x2c] sm:$0xf]
    %v1141 = vld [vmem:[%s1128 + $0x30] sm:$0xf]
    %v1142 = vld [vmem:[%s1128 + $0x34] sm:$0xf]
    %v1143 = vld [vmem:[%s1128 + $0x38] sm:$0xf]
    %v1144 = vld [vmem:[%s1128 + $0x3c] sm:$0xf]
    %v1161 = vunpack.c.l.b16 %v1129
    %v1162 = vunpack.c.l.b16 %v1130
    %v1163 = vunpack.c.l.b16 %v1131
    %v1164 = vunpack.c.l.b16 %v1132
    %v1165 = vunpack.c.l.b16 %v1133
    %v1166 = vunpack.c.l.b16 %v1134
    %v1167 = vunpack.c.l.b16 %v1135
    %v1168 = vunpack.c.l.b16 %v1136
    %v1169 = vunpack.c.l.b16 %v1137
    %v1170 = vunpack.c.l.b16 %v1138
    %v1171 = vunpack.c.l.b16 %v1139
    %v1172 = vunpack.c.l.b16 %v1140
    %v1173 = vunpack.c.l.b16 %v1141
    %v1174 = vunpack.c.l.b16 %v1142
    %v1175 = vunpack.c.l.b16 %v1143
    %v1176 = vunpack.c.l.b16 %v1144
    %v1177 = vpack.c.b16 %v1162, %v1161
    %v1178 = vpack.c.b16 %v1164, %v1163
    %v1179 = vpack.c.b16 %v1166, %v1165
    %v1180 = vpack.c.b16 %v1168, %v1167
    %v1181 = vpack.c.b16 %v1170, %v1169
    %v1182 = vpack.c.b16 %v1172, %v1171
    %v1183 = vpack.c.b16 %v1174, %v1173
    %v1184 = vpack.c.b16 %v1176, %v1175
    %v1186 = vsel %vm102, %v1177, 0
    %v1189 = vsel %vm102, %v1178, 0
    %v1192 = vsel %vm102, %v1179, 0
    %v1195 = vsel %vm102, %v1180, 0
    %v1198 = vsel %vm102, %v1181, 0
    %v1201 = vsel %vm102, %v1182, 0
    %v1204 = vsel %vm102, %v1183, 0
    %v1207 = vsel %vm102, %v1184, 0
    %1209 = vmatpush.bf16.msra.mxu0 0
    %1210 = vmatpush.bf16.msra.mxu0 0
    %1211 = vmatpush.bf16.msra.mxu0 0
    %1212 = vmatpush.bf16.msra.mxu0 0
    %1213 = vmatpush.bf16.msra.mxu0 0
    %1214 = vmatpush.bf16.msra.mxu0 %v129
    %1215 = vmatpush.bf16.msra.mxu0 %v98
    %1216 = vmatpush.bf16.msra.mxu0 %v97
    %1217 = vmatmul.bf16.gmra.mxu0 %v1186
    %v1218 = vpop.f32.mrf.mxu0
    %v1219 = vadd.f32 %v45, %v1218
    %v1220 = vpop.f32.mrf.mxu0
    %v1221 = vadd.f32 %v45, %v1220
    %1222 = vmatmul.bf16.gmra.mxu0 %v1189
    %v1223 = vpop.f32.mrf.mxu0
    %v1224 = vadd.f32 %v45, %v1223
    %v1225 = vpop.f32.mrf.mxu0
    %v1226 = vadd.f32 %v45, %v1225
    %1227 = vmatmul.bf16.gmra.mxu0 %v1192
    %v1228 = vpop.f32.mrf.mxu0
    %v1229 = vadd.f32 %v45, %v1228
    %v1230 = vpop.f32.mrf.mxu0
    %v1231 = vadd.f32 %v45, %v1230
    %1232 = vmatmul.bf16.gmra.mxu0 %v1195
    %v1233 = vpop.f32.mrf.mxu0
    %v1234 = vadd.f32 %v45, %v1233
    %v1235 = vpop.f32.mrf.mxu0
    %v1236 = vadd.f32 %v45, %v1235
    %1237 = vmatmul.bf16.gmra.mxu0 %v1198
    %v1238 = vpop.f32.mrf.mxu0
    %v1239 = vadd.f32 %v45, %v1238
    %v1240 = vpop.f32.mrf.mxu0
    %v1241 = vadd.f32 %v45, %v1240
    %1242 = vmatmul.bf16.gmra.mxu0 %v1201
    %v1243 = vpop.f32.mrf.mxu0
    %v1244 = vadd.f32 %v45, %v1243
    %v1245 = vpop.f32.mrf.mxu0
    %v1246 = vadd.f32 %v45, %v1245
    %1247 = vmatmul.bf16.gmra.mxu0 %v1204
    %v1248 = vpop.f32.mrf.mxu0
    %v1249 = vadd.f32 %v45, %v1248
    %v1250 = vpop.f32.mrf.mxu0
    %v1251 = vadd.f32 %v45, %v1250
    %1252 = vmatmul.bf16.gmra.mxu0 %v1207
    %v1253 = vpop.f32.mrf.mxu0
    %v1254 = vadd.f32 %v45, %v1253
    %v1255 = vpop.f32.mrf.mxu0
    %v1256 = vadd.f32 %v45, %v1255
    %1257 = vdwg.mxu0
    %v1258 = vxor.u32 %v1219, 2147483648
    %v1259 = vxor.u32 %v1221, 2147483648
    %v1260 = vxor.u32 %v1224, 2147483648
    %v1261 = vxor.u32 %v1226, 2147483648
    %v1262 = vxor.u32 %v1229, 2147483648
    %v1263 = vxor.u32 %v1231, 2147483648
    %v1264 = vxor.u32 %v1234, 2147483648
    %v1265 = vxor.u32 %v1236, 2147483648
    %v1266 = vxor.u32 %v1239, 2147483648
    %v1267 = vxor.u32 %v1241, 2147483648
    %v1268 = vxor.u32 %v1244, 2147483648
    %v1269 = vxor.u32 %v1246, 2147483648
    %v1270 = vxor.u32 %v1249, 2147483648
    %v1271 = vxor.u32 %v1251, 2147483648
    %v1272 = vxor.u32 %v1254, 2147483648
    %v1273 = vxor.u32 %v1256, 2147483648
    %v1274 = vmul.f32 %v1258, 1.442695
    %v1275 = vpow.pop %v1274
    %v1276 = vmul.f32 %v1259, 1.442695
    %v1277 = vpow.pop %v1276
    %v1278 = vmul.f32 %v1260, 1.442695
    %v1279 = vpow.pop %v1278
    %v1280 = vmul.f32 %v1261, 1.442695
    %v1281 = vpow.pop %v1280
    %v1282 = vmul.f32 %v1262, 1.442695
    %v1283 = vpow.pop %v1282
    %v1284 = vmul.f32 %v1263, 1.442695
    %v1285 = vpow.pop %v1284
    %v1286 = vmul.f32 %v1264, 1.442695
    %v1287 = vpow.pop %v1286
    %v1288 = vmul.f32 %v1265, 1.442695
    %v1289 = vpow.pop %v1288
    %v1290 = vmul.f32 %v1266, 1.442695
    %v1291 = vpow.pop %v1290
    %v1292 = vmul.f32 %v1267, 1.442695
    %v1293 = vpow.pop %v1292
    %v1294 = vmul.f32 %v1268, 1.442695
    %v1295 = vpow.pop %v1294
    %v1296 = vmul.f32 %v1269, 1.442695
    %v1297 = vpow.pop %v1296
    %v1298 = vmul.f32 %v1270, 1.442695
    %v1299 = vpow.pop %v1298
    %v1300 = vmul.f32 %v1271, 1.442695
    %v1301 = vpow.pop %v1300
    %v1302 = vmul.f32 %v1272, 1.442695
    %v1303 = vpow.pop %v1302
    %v1304 = vmul.f32 %v1273, 1.442695
    %v1305 = vpow.pop %v1304
    %v1306 = vadd.f32 %v1275, 1.0
    %v1307 = vadd.f32 %v1277, 1.0
    %v1308 = vadd.f32 %v1279, 1.0
    %v1309 = vadd.f32 %v1281, 1.0
    %v1310 = vadd.f32 %v1283, 1.0
    %v1311 = vadd.f32 %v1285, 1.0
    %v1312 = vadd.f32 %v1287, 1.0
    %v1313 = vadd.f32 %v1289, 1.0
    %v1314 = vadd.f32 %v1291, 1.0
    %v1315 = vadd.f32 %v1293, 1.0
    %v1316 = vadd.f32 %v1295, 1.0
    %v1317 = vadd.f32 %v1297, 1.0
    %v1318 = vadd.f32 %v1299, 1.0
    %v1319 = vadd.f32 %v1301, 1.0
    %v1320 = vadd.f32 %v1303, 1.0
    %v1321 = vadd.f32 %v1305, 1.0
    %v1322 = vrcp.pop %v1306
    %v1323 = vmul.f32 %v1306, %v1322
    %v1324 = vsub.f32 1.0, %v1323
    %v1325 = vmul.f32 %v1322, %v1324
    %v1326 = vadd.f32 %v1322, %v1325
    %vm1327 = vweird.f32 %v1306
    %vm1328 = vweird.f32 %v1322
    %vm1329 = vmor %vm1327, %vm1328
    %v1330 = vsel %vm1329, %v1322, %v1326
    %v1331 = vand.u32 2147483647, %v1306
    %vm1332 = vcmp.eq.f32.partialorder %v1331, 8.507059e+37
    %v1333 = vand.u32 %v1306, 2147483648
    %v1334 = vor.u32 1.1754944e-38, %v1333
    %v1335 = vsel %vm1332, %v1334, %v1330
    %v1336 = vmul.f32 1.0, %v1335
    %v1337 = vrcp.pop %v1307
    %v1338 = vmul.f32 %v1307, %v1337
    %v1339 = vsub.f32 1.0, %v1338
    %v1340 = vmul.f32 %v1337, %v1339
    %v1341 = vadd.f32 %v1337, %v1340
    %vm1342 = vweird.f32 %v1307
    %vm1343 = vweird.f32 %v1337
    %vm1344 = vmor %vm1342, %vm1343
    %v1345 = vsel %vm1344, %v1337, %v1341
    %v1346 = vand.u32 2147483647, %v1307
    %vm1347 = vcmp.eq.f32.partialorder %v1346, 8.507059e+37
    %v1348 = vand.u32 %v1307, 2147483648
    %v1349 = vor.u32 1.1754944e-38, %v1348
    %v1350 = vsel %vm1347, %v1349, %v1345
    %v1351 = vmul.f32 1.0, %v1350
    %v1352 = vrcp.pop %v1308
    %v1353 = vmul.f32 %v1308, %v1352
    %v1354 = vsub.f32 1.0, %v1353
    %v1355 = vmul.f32 %v1352, %v1354
    %v1356 = vadd.f32 %v1352, %v1355
    %vm1357 = vweird.f32 %v1308
    %vm1358 = vweird.f32 %v1352
    %vm1359 = vmor %vm1357, %vm1358
    %v1360 = vsel %vm1359, %v1352, %v1356
    %v1361 = vand.u32 2147483647, %v1308
    %vm1362 = vcmp.eq.f32.partialorder %v1361, 8.507059e+37
    %v1363 = vand.u32 %v1308, 2147483648
    %v1364 = vor.u32 1.1754944e-38, %v1363
    %v1365 = vsel %vm1362, %v1364, %v1360
    %v1366 = vmul.f32 1.0, %v1365
    %v1367 = vrcp.pop %v1309
    %v1368 = vmul.f32 %v1309, %v1367
    %v1369 = vsub.f32 1.0, %v1368
    %v1370 = vmul.f32 %v1367, %v1369
    %v1371 = vadd.f32 %v1367, %v1370
    %vm1372 = vweird.f32 %v1309
    %vm1373 = vweird.f32 %v1367
    %vm1374 = vmor %vm1372, %vm1373
    %v1375 = vsel %vm1374, %v1367, %v1371
    %v1376 = vand.u32 2147483647, %v1309
    %vm1377 = vcmp.eq.f32.partialorder %v1376, 8.507059e+37
    %v1378 = vand.u32 %v1309, 2147483648
    %v1379 = vor.u32 1.1754944e-38, %v1378
    %v1380 = vsel %vm1377, %v1379, %v1375
    %v1381 = vmul.f32 1.0, %v1380
    %v1382 = vrcp.pop %v1310
    %v1383 = vmul.f32 %v1310, %v1382
    %v1384 = vsub.f32 1.0, %v1383
    %v1385 = vmul.f32 %v1382, %v1384
    %v1386 = vadd.f32 %v1382, %v1385
    %vm1387 = vweird.f32 %v1310
    %vm1388 = vweird.f32 %v1382
    %vm1389 = vmor %vm1387, %vm1388
    %v1390 = vsel %vm1389, %v1382, %v1386
    %v1391 = vand.u32 2147483647, %v1310
    %vm1392 = vcmp.eq.f32.partialorder %v1391, 8.507059e+37
    %v1393 = vand.u32 %v1310, 2147483648
    %v1394 = vor.u32 1.1754944e-38, %v1393
    %v1395 = vsel %vm1392, %v1394, %v1390
    %v1396 = vmul.f32 1.0, %v1395
    %v1397 = vrcp.pop %v1311
    %v1398 = vmul.f32 %v1311, %v1397
    %v1399 = vsub.f32 1.0, %v1398
    %v1400 = vmul.f32 %v1397, %v1399
    %v1401 = vadd.f32 %v1397, %v1400
    %vm1402 = vweird.f32 %v1311
    %vm1403 = vweird.f32 %v1397
    %vm1404 = vmor %vm1402, %vm1403
    %v1405 = vsel %vm1404, %v1397, %v1401
    %v1406 = vand.u32 2147483647, %v1311
    %vm1407 = vcmp.eq.f32.partialorder %v1406, 8.507059e+37
    %v1408 = vand.u32 %v1311, 2147483648
    %v1409 = vor.u32 1.1754944e-38, %v1408
    %v1410 = vsel %vm1407, %v1409, %v1405
    %v1411 = vmul.f32 1.0, %v1410
    %v1412 = vrcp.pop %v1312
    %v1413 = vmul.f32 %v1312, %v1412
    %v1414 = vsub.f32 1.0, %v1413
    %v1415 = vmul.f32 %v1412, %v1414
    %v1416 = vadd.f32 %v1412, %v1415
    %vm1417 = vweird.f32 %v1312
    %vm1418 = vweird.f32 %v1412
    %vm1419 = vmor %vm1417, %vm1418
    %v1420 = vsel %vm1419, %v1412, %v1416
    %v1421 = vand.u32 2147483647, %v1312
    %vm1422 = vcmp.eq.f32.partialorder %v1421, 8.507059e+37
    %v1423 = vand.u32 %v1312, 2147483648
    %v1424 = vor.u32 1.1754944e-38, %v1423
    %v1425 = vsel %vm1422, %v1424, %v1420
    %v1426 = vmul.f32 1.0, %v1425
    %v1427 = vrcp.pop %v1313
    %v1428 = vmul.f32 %v1313, %v1427
    %v1429 = vsub.f32 1.0, %v1428
    %v1430 = vmul.f32 %v1427, %v1429
    %v1431 = vadd.f32 %v1427, %v1430
    %vm1432 = vweird.f32 %v1313
    %vm1433 = vweird.f32 %v1427
    %vm1434 = vmor %vm1432, %vm1433
    %v1435 = vsel %vm1434, %v1427, %v1431
    %v1436 = vand.u32 2147483647, %v1313
    %vm1437 = vcmp.eq.f32.partialorder %v1436, 8.507059e+37
    %v1438 = vand.u32 %v1313, 2147483648
    %v1439 = vor.u32 1.1754944e-38, %v1438
    %v1440 = vsel %vm1437, %v1439, %v1435
    %v1441 = vmul.f32 1.0, %v1440
    %v1442 = vrcp.pop %v1314
    %v1443 = vmul.f32 %v1314, %v1442
    %v1444 = vsub.f32 1.0, %v1443
    %v1445 = vmul.f32 %v1442, %v1444
    %v1446 = vadd.f32 %v1442, %v1445
    %vm1447 = vweird.f32 %v1314
    %vm1448 = vweird.f32 %v1442
    %vm1449 = vmor %vm1447, %vm1448
    %v1450 = vsel %vm1449, %v1442, %v1446
    %v1451 = vand.u32 2147483647, %v1314
    %vm1452 = vcmp.eq.f32.partialorder %v1451, 8.507059e+37
    %v1453 = vand.u32 %v1314, 2147483648
    %v1454 = vor.u32 1.1754944e-38, %v1453
    %v1455 = vsel %vm1452, %v1454, %v1450
    %v1456 = vmul.f32 1.0, %v1455
    %v1457 = vrcp.pop %v1315
    %v1458 = vmul.f32 %v1315, %v1457
    %v1459 = vsub.f32 1.0, %v1458
    %v1460 = vmul.f32 %v1457, %v1459
    %v1461 = vadd.f32 %v1457, %v1460
    %vm1462 = vweird.f32 %v1315
    %vm1463 = vweird.f32 %v1457
    %vm1464 = vmor %vm1462, %vm1463
    %v1465 = vsel %vm1464, %v1457, %v1461
    %v1466 = vand.u32 2147483647, %v1315
    %vm1467 = vcmp.eq.f32.partialorder %v1466, 8.507059e+37
    %v1468 = vand.u32 %v1315, 2147483648
    %v1469 = vor.u32 1.1754944e-38, %v1468
    %v1470 = vsel %vm1467, %v1469, %v1465
    %v1471 = vmul.f32 1.0, %v1470
    %v1472 = vrcp.pop %v1316
    %v1473 = vmul.f32 %v1316, %v1472
    %v1474 = vsub.f32 1.0, %v1473
    %v1475 = vmul.f32 %v1472, %v1474
    %v1476 = vadd.f32 %v1472, %v1475
    %vm1477 = vweird.f32 %v1316
    %vm1478 = vweird.f32 %v1472
    %vm1479 = vmor %vm1477, %vm1478
    %v1480 = vsel %vm1479, %v1472, %v1476
    %v1481 = vand.u32 2147483647, %v1316
    %vm1482 = vcmp.eq.f32.partialorder %v1481, 8.507059e+37
    %v1483 = vand.u32 %v1316, 2147483648
    %v1484 = vor.u32 1.1754944e-38, %v1483
    %v1485 = vsel %vm1482, %v1484, %v1480
    %v1486 = vmul.f32 1.0, %v1485
    %v1487 = vrcp.pop %v1317
    %v1488 = vmul.f32 %v1317, %v1487
    %v1489 = vsub.f32 1.0, %v1488
    %v1490 = vmul.f32 %v1487, %v1489
    %v1491 = vadd.f32 %v1487, %v1490
    %vm1492 = vweird.f32 %v1317
    %vm1493 = vweird.f32 %v1487
    %vm1494 = vmor %vm1492, %vm1493
    %v1495 = vsel %vm1494, %v1487, %v1491
    %v1496 = vand.u32 2147483647, %v1317
    %vm1497 = vcmp.eq.f32.partialorder %v1496, 8.507059e+37
    %v1498 = vand.u32 %v1317, 2147483648
    %v1499 = vor.u32 1.1754944e-38, %v1498
    %v1500 = vsel %vm1497, %v1499, %v1495
    %v1501 = vmul.f32 1.0, %v1500
    %v1502 = vrcp.pop %v1318
    %v1503 = vmul.f32 %v1318, %v1502
    %v1504 = vsub.f32 1.0, %v1503
    %v1505 = vmul.f32 %v1502, %v1504
    %v1506 = vadd.f32 %v1502, %v1505
    %vm1507 = vweird.f32 %v1318
    %vm1508 = vweird.f32 %v1502
    %vm1509 = vmor %vm1507, %vm1508
    %v1510 = vsel %vm1509, %v1502, %v1506
    %v1511 = vand.u32 2147483647, %v1318
    %vm1512 = vcmp.eq.f32.partialorder %v1511, 8.507059e+37
    %v1513 = vand.u32 %v1318, 2147483648
    %v1514 = vor.u32 1.1754944e-38, %v1513
    %v1515 = vsel %vm1512, %v1514, %v1510
    %v1516 = vmul.f32 1.0, %v1515
    %v1517 = vrcp.pop %v1319
    %v1518 = vmul.f32 %v1319, %v1517
    %v1519 = vsub.f32 1.0, %v1518
    %v1520 = vmul.f32 %v1517, %v1519
    %v1521 = vadd.f32 %v1517, %v1520
    %vm1522 = vweird.f32 %v1319
    %vm1523 = vweird.f32 %v1517
    %vm1524 = vmor %vm1522, %vm1523
    %v1525 = vsel %vm1524, %v1517, %v1521
    %v1526 = vand.u32 2147483647, %v1319
    %vm1527 = vcmp.eq.f32.partialorder %v1526, 8.507059e+37
    %v1528 = vand.u32 %v1319, 2147483648
    %v1529 = vor.u32 1.1754944e-38, %v1528
    %v1530 = vsel %vm1527, %v1529, %v1525
    %v1531 = vmul.f32 1.0, %v1530
    %v1532 = vrcp.pop %v1320
    %v1533 = vmul.f32 %v1320, %v1532
    %v1534 = vsub.f32 1.0, %v1533
    %v1535 = vmul.f32 %v1532, %v1534
    %v1536 = vadd.f32 %v1532, %v1535
    %vm1537 = vweird.f32 %v1320
    %vm1538 = vweird.f32 %v1532
    %vm1539 = vmor %vm1537, %vm1538
    %v1540 = vsel %vm1539, %v1532, %v1536
    %v1541 = vand.u32 2147483647, %v1320
    %vm1542 = vcmp.eq.f32.partialorder %v1541, 8.507059e+37
    %v1543 = vand.u32 %v1320, 2147483648
    %v1544 = vor.u32 1.1754944e-38, %v1543
    %v1545 = vsel %vm1542, %v1544, %v1540
    %v1546 = vmul.f32 1.0, %v1545
    %v1547 = vrcp.pop %v1321
    %v1548 = vmul.f32 %v1321, %v1547
    %v1549 = vsub.f32 1.0, %v1548
    %v1550 = vmul.f32 %v1547, %v1549
    %v1551 = vadd.f32 %v1547, %v1550
    %vm1552 = vweird.f32 %v1321
    %vm1553 = vweird.f32 %v1547
    %vm1554 = vmor %vm1552, %vm1553
    %v1555 = vsel %vm1554, %v1547, %v1551
    %v1556 = vand.u32 2147483647, %v1321
    %vm1557 = vcmp.eq.f32.partialorder %v1556, 8.507059e+37
    %v1558 = vand.u32 %v1321, 2147483648
    %v1559 = vor.u32 1.1754944e-38, %v1558
    %v1560 = vsel %vm1557, %v1559, %v1555
    %v1561 = vmul.f32 1.0, %v1560
    %v1562 = vmul.f32 %v1219, %v1336
    %v1563 = vmul.f32 %v1221, %v1351
    %v1564 = vmul.f32 %v1224, %v1366
    %v1565 = vmul.f32 %v1226, %v1381
    %v1566 = vmul.f32 %v1229, %v1396
    %v1567 = vmul.f32 %v1231, %v1411
    %v1568 = vmul.f32 %v1234, %v1426
    %v1569 = vmul.f32 %v1236, %v1441
    %v1570 = vmul.f32 %v1239, %v1456
    %v1571 = vmul.f32 %v1241, %v1471
    %v1572 = vmul.f32 %v1244, %v1486
    %v1573 = vmul.f32 %v1246, %v1501
    %v1574 = vmul.f32 %v1249, %v1516
    %v1575 = vmul.f32 %v1251, %v1531
    %v1576 = vmul.f32 %v1254, %v1546
    %v1577 = vmul.f32 %v1256, %v1561
    %v1578 = vpack.c.bf16 %v1563, %v1562
    %v1579 = vpack.c.bf16 %v1565, %v1564
    %v1580 = vpack.c.bf16 %v1567, %v1566
    %v1581 = vpack.c.bf16 %v1569, %v1568
    %v1582 = vpack.c.bf16 %v1571, %v1570
    %v1583 = vpack.c.bf16 %v1573, %v1572
    %v1584 = vpack.c.bf16 %v1575, %v1574
    %v1585 = vpack.c.bf16 %v1577, %v1576
    %1586 = vmatpush.bf16.msra.mxu0 %v1021
    %1587 = vmatpush.bf16.msra.mxu0 %v1020
    %1588 = vmatpush.bf16.msra.mxu0 %v1019
    %1589 = vmatpush.bf16.msra.mxu0 %v1018
    %1590 = vmatpush.bf16.msra.mxu0 %v1017
    %1591 = vmatpush.bf16.msra.mxu0 %v1016
    %1592 = vmatpush.bf16.msra.mxu0 %v1015
    %1593 = vmatpush.bf16.msra.mxu0 %v1014
    %1594 = vmatmul.bf16.gmra.mxu0 %v1578
    %v1595 = vpop.f32.mrf.mxu0
    %v1596 = vadd.f32 0.0, %v1595
    %v1597 = vpop.f32.mrf.mxu0
    %v1598 = vadd.f32 0.0, %v1597
    %1599 = vmatmul.bf16.gmra.mxu0 %v1579
    %v1600 = vpop.f32.mrf.mxu0
    %v1601 = vadd.f32 0.0, %v1600
    %v1602 = vpop.f32.mrf.mxu0
    %v1603 = vadd.f32 0.0, %v1602
    %1604 = vmatmul.bf16.gmra.mxu0 %v1580
    %v1605 = vpop.f32.mrf.mxu0
    %v1606 = vadd.f32 0.0, %v1605
    %v1607 = vpop.f32.mrf.mxu0
    %v1608 = vadd.f32 0.0, %v1607
    %1609 = vmatmul.bf16.gmra.mxu0 %v1581
    %v1610 = vpop.f32.mrf.mxu0
    %v1611 = vadd.f32 0.0, %v1610
    %v1612 = vpop.f32.mrf.mxu0
    %v1613 = vadd.f32 0.0, %v1612
    %1614 = vmatmul.bf16.gmra.mxu0 %v1582
    %v1615 = vpop.f32.mrf.mxu0
    %v1616 = vadd.f32 0.0, %v1615
    %v1617 = vpop.f32.mrf.mxu0
    %v1618 = vadd.f32 0.0, %v1617
    %1619 = vmatmul.bf16.gmra.mxu0 %v1583
    %v1620 = vpop.f32.mrf.mxu0
    %v1621 = vadd.f32 0.0, %v1620
    %v1622 = vpop.f32.mrf.mxu0
    %v1623 = vadd.f32 0.0, %v1622
    %1624 = vmatmul.bf16.gmra.mxu0 %v1584
    %v1625 = vpop.f32.mrf.mxu0
    %v1626 = vadd.f32 0.0, %v1625
    %v1627 = vpop.f32.mrf.mxu0
    %v1628 = vadd.f32 0.0, %v1627
    %1629 = vmatmul.bf16.gmra.mxu0 %v1585
    %v1630 = vpop.f32.mrf.mxu0
    %v1631 = vadd.f32 0.0, %v1630
    %v1632 = vpop.f32.mrf.mxu0
    %v1633 = vadd.f32 0.0, %v1632
    %1634 = vdwg.mxu0
    %v1635 = vadd.f32 %v1089, %v1596
    %v1636 = vadd.f32 %v1091, %v1598
    %v1637 = vadd.f32 %v1094, %v1601
    %v1638 = vadd.f32 %v1096, %v1603
    %v1639 = vadd.f32 %v1099, %v1606
    %v1640 = vadd.f32 %v1101, %v1608
    %v1641 = vadd.f32 %v1104, %v1611
    %v1642 = vadd.f32 %v1106, %v1613
    %v1643 = vadd.f32 %v1109, %v1616
    %v1644 = vadd.f32 %v1111, %v1618
    %v1645 = vadd.f32 %v1114, %v1621
    %v1646 = vadd.f32 %v1116, %v1623
    %v1647 = vadd.f32 %v1119, %v1626
    %v1648 = vadd.f32 %v1121, %v1628
    %v1649 = vadd.f32 %v1124, %v1631
    %v1650 = vadd.f32 %v1126, %v1633
    %v1651 = vld [vmem:[%s4] sm:$0x1]
    %v1653 = vperm.slane %v1651, 0
    %v1655 = vadd.f32 %v1635, %v1653
    %v1656 = vadd.f32 %v1636, %v1653
    %v1657 = vadd.f32 %v1637, %v1653
    %v1658 = vadd.f32 %v1638, %v1653
    %v1659 = vadd.f32 %v1639, %v1653
    %v1660 = vadd.f32 %v1640, %v1653
    %v1661 = vadd.f32 %v1641, %v1653
    %v1662 = vadd.f32 %v1642, %v1653
    %v1663 = vadd.f32 %v1643, %v1653
    %v1664 = vadd.f32 %v1644, %v1653
    %v1665 = vadd.f32 %v1645, %v1653
    %v1666 = vadd.f32 %v1646, %v1653
    %v1667 = vadd.f32 %v1647, %v1653
    %v1668 = vadd.f32 %v1648, %v1653
    %v1669 = vadd.f32 %v1649, %v1653
    %v1670 = vadd.f32 %v1650, %v1653
    %1671 = vst [vmem:[#allocation2] sm:$0xff] %v1655
    %1672 = vst [vmem:[#allocation2 + $0x8] sm:$0xff] %v1656
    %1673 = vst [vmem:[#allocation2 + $0x10] sm:$0xff] %v1657
    %1674 = vst [vmem:[#allocation2 + $0x18] sm:$0xff] %v1658
    %1675 = vst [vmem:[#allocation2 + $0x20] sm:$0xff] %v1659
    %1676 = vst [vmem:[#allocation2 + $0x28] sm:$0xff] %v1660
    %1677 = vst [vmem:[#allocation2 + $0x30] sm:$0xff] %v1661
    %1678 = vst [vmem:[#allocation2 + $0x38] sm:$0xff] %v1662
    %1679 = vst [vmem:[#allocation2 + $0x40] sm:$0xff] %v1663
    %1680 = vst [vmem:[#allocation2 + $0x48] sm:$0xff] %v1664
    %1681 = vst [vmem:[#allocation2 + $0x50] sm:$0xff] %v1665
    %1682 = vst [vmem:[#allocation2 + $0x58] sm:$0xff] %v1666
    %1683 = vst [vmem:[#allocation2 + $0x60] sm:$0xff] %v1667
    %1684 = vst [vmem:[#allocation2 + $0x68] sm:$0xff] %v1668
    %1685 = vst [vmem:[#allocation2 + $0x70] sm:$0xff] %v1669
    %1686 = vst [vmem:[#allocation2 + $0x78] sm:$0xff] %v1670
    // Predicated region
    $region22: #{tpu_custom_call.1} parent=1 // pred_check
      _
    $region23: #{tpu_custom_call.1} parent=1 // pred_check_branch
      %1688 = sbr.rel (0) target = $region25
    $region24: #{tpu_custom_call.1} parent=1 // pred_region
      %1690 = vsyncadd [#allocation3], 0
      %s1691 = sshll.u32 [#allocation2], 4
      %s1692 = int_to_ptr.vmem [resolvable:$true] %s1691
      %s1693 = sshll.u32 %s5, 4
      %s1694 = int_to_ptr.hbm [resolvable:$true] %s1693
      %1699 = dma.vmem_to_hbm [thread:$0]  %s1692, 2048, %s1694, [#allocation3], 128, 128, 8
    $region25: #{tpu_custom_call.1} parent=1 // pred_fallthru
      _
    // Predicated region
    $region26: #{tpu_custom_call.1} parent=1 // pred_check
      _
    $region27: #{tpu_custom_call.1} parent=1 // pred_check_branch
      %1701 = sbr.rel (0) target = $region29
    $region28: #{tpu_custom_call.1} parent=1 // pred_region
      %1703 = dma.done [#allocation3], 2048
    $region29: #{tpu_custom_call.1} parent=1 // pred_fallthru
      _
    %1704 = vsyncpa [#allocation3], 1

</llo_original>
